<compile_context>
chip_gen: v6e
topology: v6e:2x2x1
jax: 0.10.0
libtpu: 0.0.40
codegen_flags: <defaults>
</compile_context>

<pallas_src>
import functools

import jax
import jax.numpy as jnp
from jax.experimental import pallas as pl
from jax.experimental.pallas import tpu as pltpu


def cross_attention_kernel(
    x_ref,
    w1_ref, b1_ref, w2_ref, b2_ref,      # modality_encoder: E->2E, 2E->E
    w3_ref, b3_ref, w4_ref, b4_ref,      # task_encoder:     E->3E, 3E->E
    wq_ref, bq_ref, wk_ref, bk_ref,      # shared q/k projections: E->E
    wv_ref, bv_ref,                      # shared v projection: E->Ep (lane-padded)
    o_ref,
    *, compute_dtype, approx_recip,
):
    bB, S, E = x_ref.shape
    Ep = wv_ref.shape[1]                 # 128-lane-padded output width
    M = bB * S
    cd = compute_dtype

    def mm(a, w_ref, b_ref):
        # MXU matmul: operands in compute dtype, f32 accumulation, f32 bias.
        return (jnp.dot(a.astype(cd), w_ref[...],
                        preferred_element_type=jnp.float32) + b_ref[...])

    def softmax_lastdim(s):
        m = jnp.max(s, axis=-1, keepdims=True)
        e = jnp.exp(s - m)
        d = jnp.sum(e, axis=-1, keepdims=True)
        if approx_recip:
            # EUP approximate reciprocal: separate bundle slot, nearly free.
            return e * pl.reciprocal(d, approx=True)
        return e / d

    # Flatten the batch block into MXU rows: (bB, S, E) -> (bB*S, E).
    xb = x_ref[...].reshape(M, E)

    # Encoders (separate, lane-aligned matmuls; no fused-weight slicing).
    u = jax.nn.sigmoid(mm(jnp.maximum(mm(xb, w1_ref, b1_ref), 0.0),
                          w2_ref, b2_ref))                       # (M, E)
    r = jax.nn.sigmoid(mm(jnp.maximum(mm(xb, w3_ref, b3_ref), 0.0),
                          w4_ref, b4_ref))                       # (M, E)

    # Shared q/k/v projections on both streams: 6 small matmuls, no copies.
    uq = mm(u, wq_ref, bq_ref).reshape(bB, S, E)
    uk = mm(u, wk_ref, bk_ref).reshape(bB, S, E)
    uv = mm(u, wv_ref, bv_ref).reshape(bB, S, Ep)                # padded lanes are 0
    rq = mm(r, wq_ref, bq_ref).reshape(bB, S, E)
    rk = mm(r, wk_ref, bk_ref).reshape(bB, S, E)
    rv = mm(r, wv_ref, bv_ref).reshape(bB, S, Ep)

    def attend(q, k, v):
        # Batched attention on the MXU (einsum, NOT jnp.dot, for 3-D operands).
        s = jnp.einsum("bqe,bke->bqk", q.astype(cd), k.astype(cd),
                       preferred_element_type=jnp.float32)
        p = softmax_lastdim(s)
        return jnp.einsum("bqk,bke->bqe", p.astype(cd), v.astype(cd),
                          preferred_element_type=jnp.float32)

    ru = attend(uq, rk, rv)                                      # (bB, S, Ep)
    ur = attend(rq, uk, uv)                                      # (bB, S, Ep)

    # 0.6 * ((ru + ur) / 2) == 0.3 * (ru + ur); lane-dense (Ep-wide) store.
    o_ref[...] = (0.3 * (ru + ur)).astype(o_ref.dtype)


def _pick_block_batch(B, S, E, Ep, *, vmem_budget_bytes=20 << 20,
                      max_rows=2048, min_grid_steps=2):
    """Rows per grid step from a VMEM budget; keep >= 2 grid steps (v7x TCs)."""
    # Rough f32 bytes of live intermediates per MXU row inside the kernel
    # (x, relu acts, u/r, q/k for both streams, padded v/ru/ur, score rows)
    # plus the double-buffered x/out pipeline blocks.
    bytes_per_row = 4 * (13 * E + 6 * Ep + 2 * S)
    rows = max(S, min(max_rows, vmem_budget_bytes // max(bytes_per_row, 1)))
    bb = max(1, rows // S)
    if B >= min_grid_steps:
        # Ensure the parallel grid axis has work for both v7x TensorCores.
        bb = min(bb, pl.cdiv(B, min_grid_steps))
    return min(bb, B)


def prepare_params(params, *, compute_dtype=jnp.bfloat16, lane=128):
    """One-time parameter prep (hoisted out of the per-call path).

    Weights are stored as [in_features, out_features]; MXU weight operands are
    cast to `compute_dtype` (bf16 default on all TPU generations incl. v5e),
    biases stay f32.  The v-projection output dim is zero-padded up to a
    multiple of 128 lanes so the attention outputs and the final store are
    lane-dense.
    """
    E = params["w1"].shape[0]
    Ep = -(-E // lane) * lane
    pad = Ep - E
    cd = compute_dtype
    wv = jnp.pad(params["wv"], ((0, 0), (0, pad)))
    bv = jnp.pad(params["bv"], ((0, 0), (0, pad)))
    prepped = dict(
        w1=params["w1"].astype(cd), b1=params["b1"],
        w2=params["w2"].astype(cd), b2=params["b2"],
        w3=params["w3"].astype(cd), b3=params["b3"],
        w4=params["w4"].astype(cd), b4=params["b4"],
        wq=params["wq"].astype(cd), bq=params["bq"],
        wk=params["wk"].astype(cd), bk=params["bk"],
        wv=wv.astype(cd), bv=bv,
    )
    prepped["embed_dim"] = E
    prepped["padded_dim"] = Ep
    prepped["compute_dtype"] = cd
    return prepped


_PARAM_ORDER = ("w1", "b1", "w2", "b2", "w3", "b3", "w4", "b4",
                "wq", "bq", "wk", "bk", "wv", "bv")


def cross_attention(x, prepped, *, block_batch=None, approx_recip=True):
    """x: [B, S, E] float32.  prepped: output of prepare_params()."""
    B, S, E = x.shape
    assert E == prepped["embed_dim"]
    Ep = prepped["padded_dim"]
    cd = prepped["compute_dtype"]

    if block_batch is None:
        block_batch = _pick_block_batch(B, S, E, Ep)
    grid_b = pl.cdiv(B, block_batch)
    B_pad = grid_b * block_batch
    if B_pad != B:
        # Ragged batch: pad rather than forcing block_batch to divide B;
        # padded rows compute harmless values and are sliced off below.
        x = jnp.pad(x, ((0, B_pad - B), (0, 0), (0, 0)))

    plist = [prepped[k] for k in _PARAM_ORDER]

    kernel = functools.partial(cross_attention_kernel,
                               compute_dtype=cd, approx_recip=approx_recip)

    x_spec = pl.BlockSpec((block_batch, S, E), lambda b: (b, 0, 0))
    # Full-array (untiled) blocks for every parameter; constant index_map so
    # the pipeline never re-fetches them across the batch grid.
    param_specs = [
        pl.BlockSpec(p.shape, lambda b, nd=p.ndim: (0,) * nd) for p in plist
    ]
    out_spec = pl.BlockSpec((block_batch, S, Ep), lambda b: (b, 0, 0))

    out_padded = pl.pallas_call(
        kernel,
        out_shape=jax.ShapeDtypeStruct((B_pad, S, Ep), jnp.float32),
        grid_spec=pltpu.PrefetchScalarGridSpec(
            num_scalar_prefetch=0,
            grid=(grid_b,),
            in_specs=[x_spec] + param_specs,
            out_specs=out_spec,
        ),
        compiler_params=pltpu.CompilerParams(
            dimension_semantics=("parallel",),
            vmem_limit_bytes=32 << 20,
        ),
    )(x, *plist)

    return out_padded[:B, :, :E]


def init_params(key, embed_dim):
    """Deterministic init. Weights stored as [in_features, out_features]."""
    def linear_init(key, fan_in, fan_out):
        kw, kb = jax.random.split(key)
        bound = 1.0 / jnp.sqrt(fan_in)
        w = jax.random.uniform(kw, (fan_in, fan_out), jnp.float32, -bound, bound)
        b = jax.random.uniform(kb, (1, fan_out), jnp.float32, -bound, bound)
        return w, b

    E = embed_dim
    keys = jax.random.split(key, 7)
    w1, b1 = linear_init(keys[0], E, 2 * E)      # modality_encoder[0]
    w2, b2 = linear_init(keys[1], 2 * E, E)      # modality_encoder[2]
    w3, b3 = linear_init(keys[2], E, 3 * E)      # task_encoder[0]
    w4, b4 = linear_init(keys[3], 3 * E, E)      # task_encoder[2]
    wq, bq = linear_init(keys[4], E, E)
    wk, bk = linear_init(keys[5], E, E)
    wv, bv = linear_init(keys[6], E, E)
    return dict(w1=w1, b1=b1, w2=w2, b2=b2, w3=w3, b3=b3, w4=w4, b4=b4,
                wq=wq, bq=bq, wk=wk, bk=bk, wv=wv, bv=bv)


def cross_attention_ref(x, p):
    """Plain-JAX f32 reference (eval-mode dropout, no 1/sqrt(d) scaling)."""
    with jax.default_matmul_precision("highest"):
        def lin(h, w, b):
            return h @ w + b
        u = jax.nn.sigmoid(lin(jnp.maximum(lin(x, p["w1"], p["b1"]), 0.0),
                               p["w2"], p["b2"]))
        r = jax.nn.sigmoid(lin(jnp.maximum(lin(x, p["w3"], p["b3"]), 0.0),
                               p["w4"], p["b4"]))
        uq, uk, uv = (lin(u, p["wq"], p["bq"]), lin(u, p["wk"], p["bk"]),
                      lin(u, p["wv"], p["bv"]))
        rq, rk, rv = (lin(r, p["wq"], p["bq"]), lin(r, p["wk"], p["bk"]),
                      lin(r, p["wv"], p["bv"]))
        su = jax.nn.softmax(jnp.einsum("bqe,bke->bqk", uq, rk), axis=-1)
        ru = jnp.einsum("bqk,bke->bqe", su, rv)
        sr = jax.nn.softmax(jnp.einsum("bqe,bke->bqk", rq, uk), axis=-1)
        ur = jnp.einsum("bqk,bke->bqe", sr, uv)
        return 0.6 * (ru + ur) / 2.0


if __name__ == "__main__":
    B, S, E = 2, 8, 32
    key = jax.random.PRNGKey(0)
    kx, kp = jax.random.split(key)
    x = jax.random.normal(kx, (B, S, E), dtype=jnp.float32)
    params = init_params(kp, E)

    ref = cross_attention_ref(x, params)

    # Strict-parity mode: f32 MXU operands, exact softmax reciprocal.
    prepped_f32 = prepare_params(params, compute_dtype=jnp.float32)
    out_f32 = jax.block_until_ready(
        cross_attention(x, prepped_f32, approx_recip=False))
    assert out_f32.shape == (B, S, E)
    assert jnp.allclose(out_f32, ref, atol=2e-3, rtol=2e-3), \
        "f32 kernel mismatch vs reference"

    # Default fast path: bf16 MXU operands (all generations), approx recip.
    prepped_bf16 = prepare_params(params)  # compute_dtype=bf16
    out_bf16 = jax.block_until_ready(cross_attention(x, prepped_bf16))
    assert out_bf16.shape == (B, S, E)
    assert jnp.allclose(out_bf16, ref, atol=5e-2, rtol=5e-2), \
        "bf16 kernel mismatch vs reference"

    print("KERNEL_OK")
</pallas_src>

<mosaic_0001>
module attributes {stable_mosaic.version = 11 : i64} {
  func.func @cross_attention_kernel(%arg0: i32, %arg1: memref<1x8x32xf32, #tpu.memory_space<vmem>>, %arg2: memref<32x64xf32, #tpu.memory_space<vmem>>, %arg3: memref<1x64xf32, #tpu.memory_space<vmem>>, %arg4: memref<64x32xf32, #tpu.memory_space<vmem>>, %arg5: memref<1x32xf32, #tpu.memory_space<vmem>>, %arg6: memref<32x96xf32, #tpu.memory_space<vmem>>, %arg7: memref<1x96xf32, #tpu.memory_space<vmem>>, %arg8: memref<96x32xf32, #tpu.memory_space<vmem>>, %arg9: memref<1x32xf32, #tpu.memory_space<vmem>>, %arg10: memref<32x32xf32, #tpu.memory_space<vmem>>, %arg11: memref<1x32xf32, #tpu.memory_space<vmem>>, %arg12: memref<32x32xf32, #tpu.memory_space<vmem>>, %arg13: memref<1x32xf32, #tpu.memory_space<vmem>>, %arg14: memref<32x128xf32, #tpu.memory_space<vmem>>, %arg15: memref<1x128xf32, #tpu.memory_space<vmem>>, %arg16: memref<1x8x128xf32, #tpu.memory_space<vmem>>) attributes {dimension_semantics = [#tpu.dimension_semantics<parallel>], iteration_bounds = array<i64: 2>, scalar_prefetch = 0 : i64, scratch_operands = 0 : i64, tpu.core_type = #tpu.core_type<tc>, window_params = [{transform_indices = @transform_0, window_bounds = array<i64: 1, 8, 32>}, {pipeline_mode = #tpu.pipeline_mode<synchronous>, transform_indices = @transform_1, window_bounds = array<i64: 32, 64>}, {pipeline_mode = #tpu.pipeline_mode<synchronous>, transform_indices = @transform_2, window_bounds = array<i64: 1, 64>}, {pipeline_mode = #tpu.pipeline_mode<synchronous>, transform_indices = @transform_3, window_bounds = array<i64: 64, 32>}, {pipeline_mode = #tpu.pipeline_mode<synchronous>, transform_indices = @transform_4, window_bounds = array<i64: 1, 32>}, {pipeline_mode = #tpu.pipeline_mode<synchronous>, transform_indices = @transform_5, window_bounds = array<i64: 32, 96>}, {pipeline_mode = #tpu.pipeline_mode<synchronous>, transform_indices = @transform_6, window_bounds = array<i64: 1, 96>}, {pipeline_mode = #tpu.pipeline_mode<synchronous>, transform_indices = @transform_7, window_bounds = array<i64: 96, 32>}, {pipeline_mode = #tpu.pipeline_mode<synchronous>, transform_indices = @transform_8, window_bounds = array<i64: 1, 32>}, {pipeline_mode = #tpu.pipeline_mode<synchronous>, transform_indices = @transform_9, window_bounds = array<i64: 32, 32>}, {pipeline_mode = #tpu.pipeline_mode<synchronous>, transform_indices = @transform_10, window_bounds = array<i64: 1, 32>}, {pipeline_mode = #tpu.pipeline_mode<synchronous>, transform_indices = @transform_11, window_bounds = array<i64: 32, 32>}, {pipeline_mode = #tpu.pipeline_mode<synchronous>, transform_indices = @transform_12, window_bounds = array<i64: 1, 32>}, {pipeline_mode = #tpu.pipeline_mode<synchronous>, transform_indices = @transform_13, window_bounds = array<i64: 32, 128>}, {pipeline_mode = #tpu.pipeline_mode<synchronous>, transform_indices = @transform_14, window_bounds = array<i64: 1, 128>}, {transform_indices = @transform_15, window_bounds = array<i64: 1, 8, 128>}]} {
    %c0 = arith.constant 0 : index
    %c0_0 = arith.constant 0 : index
    %c0_1 = arith.constant 0 : index
    %0 = vector.load %arg1[%c0, %c0_0, %c0_1] : memref<1x8x32xf32, #tpu.memory_space<vmem>>, vector<1x8x32xf32>
    %1 = vector.shape_cast %0 : vector<1x8x32xf32> to vector<8x32xf32>
    %c0_2 = arith.constant 0 : index
    %c0_3 = arith.constant 0 : index
    %2 = vector.load %arg2[%c0_2, %c0_3] : memref<32x64xf32, #tpu.memory_space<vmem>>, vector<32x64xf32>
    %cst = arith.constant dense<0.000000e+00> : vector<8x64xf32>
    %3 = tpu.matmul %1, %2, %cst {dimension_numbers = #tpu.dot_dimension_numbers<[1], [0], [0], [1], [0, 0, 1, 1], [], []>} : vector<8x32xf32>, vector<32x64xf32>, vector<8x64xf32> -> vector<8x64xf32>
    %c0_4 = arith.constant 0 : index
    %c0_5 = arith.constant 0 : index
    %4 = vector.load %arg3[%c0_4, %c0_5] : memref<1x64xf32, #tpu.memory_space<vmem>>, vector<1x64xf32>
    %5 = vector.broadcast %4 : vector<1x64xf32> to vector<8x64xf32>
    %6 = arith.addf %3, %5 : vector<8x64xf32>
    %cst_6 = arith.constant 0.000000e+00 : f32
    %7 = vector.broadcast %cst_6 : f32 to vector<8x64xf32>
    %8 = arith.maximumf %6, %7 : vector<8x64xf32>
    %c0_7 = arith.constant 0 : index
    %c0_8 = arith.constant 0 : index
    %9 = vector.load %arg4[%c0_7, %c0_8] : memref<64x32xf32, #tpu.memory_space<vmem>>, vector<64x32xf32>
    %cst_9 = arith.constant dense<0.000000e+00> : vector<8x32xf32>
    %10 = tpu.matmul %8, %9, %cst_9 {dimension_numbers = #tpu.dot_dimension_numbers<[1], [0], [0], [1], [0, 0, 1, 1], [], []>} : vector<8x64xf32>, vector<64x32xf32>, vector<8x32xf32> -> vector<8x32xf32>
    %c0_10 = arith.constant 0 : index
    %c0_11 = arith.constant 0 : index
    %11 = vector.load %arg5[%c0_10, %c0_11] : memref<1x32xf32, #tpu.memory_space<vmem>>, vector<1x32xf32>
    %12 = vector.broadcast %11 : vector<1x32xf32> to vector<8x32xf32>
    %13 = arith.addf %10, %12 : vector<8x32xf32>
    %14 = arith.negf %13 : vector<8x32xf32>
    %15 = math.exp %14 : vector<8x32xf32>
    %cst_12 = arith.constant 1.000000e+00 : f32
    %16 = vector.broadcast %cst_12 : f32 to vector<8x32xf32>
    %17 = arith.addf %16, %15 : vector<8x32xf32>
    %18 = arith.divf %16, %17 : vector<8x32xf32>
    %c0_13 = arith.constant 0 : index
    %c0_14 = arith.constant 0 : index
    %19 = vector.load %arg6[%c0_13, %c0_14] : memref<32x96xf32, #tpu.memory_space<vmem>>, vector<32x96xf32>
    %cst_15 = arith.constant dense<0.000000e+00> : vector<8x96xf32>
    %20 = tpu.matmul %1, %19, %cst_15 {dimension_numbers = #tpu.dot_dimension_numbers<[1], [0], [0], [1], [0, 0, 1, 1], [], []>} : vector<8x32xf32>, vector<32x96xf32>, vector<8x96xf32> -> vector<8x96xf32>
    %c0_16 = arith.constant 0 : index
    %c0_17 = arith.constant 0 : index
    %21 = vector.load %arg7[%c0_16, %c0_17] : memref<1x96xf32, #tpu.memory_space<vmem>>, vector<1x96xf32>
    %22 = vector.broadcast %21 : vector<1x96xf32> to vector<8x96xf32>
    %23 = arith.addf %20, %22 : vector<8x96xf32>
    %cst_18 = arith.constant 0.000000e+00 : f32
    %24 = vector.broadcast %cst_18 : f32 to vector<8x96xf32>
    %25 = arith.maximumf %23, %24 : vector<8x96xf32>
    %c0_19 = arith.constant 0 : index
    %c0_20 = arith.constant 0 : index
    %26 = vector.load %arg8[%c0_19, %c0_20] : memref<96x32xf32, #tpu.memory_space<vmem>>, vector<96x32xf32>
    %cst_21 = arith.constant dense<0.000000e+00> : vector<8x32xf32>
    %27 = tpu.matmul %25, %26, %cst_21 {dimension_numbers = #tpu.dot_dimension_numbers<[1], [0], [0], [1], [0, 0, 1, 1], [], []>} : vector<8x96xf32>, vector<96x32xf32>, vector<8x32xf32> -> vector<8x32xf32>
    %c0_22 = arith.constant 0 : index
    %c0_23 = arith.constant 0 : index
    %28 = vector.load %arg9[%c0_22, %c0_23] : memref<1x32xf32, #tpu.memory_space<vmem>>, vector<1x32xf32>
    %29 = vector.broadcast %28 : vector<1x32xf32> to vector<8x32xf32>
    %30 = arith.addf %27, %29 : vector<8x32xf32>
    %31 = arith.negf %30 : vector<8x32xf32>
    %32 = math.exp %31 : vector<8x32xf32>
    %cst_24 = arith.constant 1.000000e+00 : f32
    %33 = vector.broadcast %cst_24 : f32 to vector<8x32xf32>
    %34 = arith.addf %33, %32 : vector<8x32xf32>
    %35 = arith.divf %33, %34 : vector<8x32xf32>
    %c0_25 = arith.constant 0 : index
    %c0_26 = arith.constant 0 : index
    %36 = vector.load %arg10[%c0_25, %c0_26] : memref<32x32xf32, #tpu.memory_space<vmem>>, vector<32x32xf32>
    %cst_27 = arith.constant dense<0.000000e+00> : vector<8x32xf32>
    %37 = tpu.matmul %18, %36, %cst_27 {dimension_numbers = #tpu.dot_dimension_numbers<[1], [0], [0], [1], [0, 0, 1, 1], [], []>} : vector<8x32xf32>, vector<32x32xf32>, vector<8x32xf32> -> vector<8x32xf32>
    %c0_28 = arith.constant 0 : index
    %c0_29 = arith.constant 0 : index
    %38 = vector.load %arg11[%c0_28, %c0_29] : memref<1x32xf32, #tpu.memory_space<vmem>>, vector<1x32xf32>
    %39 = vector.broadcast %38 : vector<1x32xf32> to vector<8x32xf32>
    %40 = arith.addf %37, %39 : vector<8x32xf32>
    %41 = vector.shape_cast %40 : vector<8x32xf32> to vector<1x8x32xf32>
    %c0_30 = arith.constant 0 : index
    %c0_31 = arith.constant 0 : index
    %42 = vector.load %arg12[%c0_30, %c0_31] : memref<32x32xf32, #tpu.memory_space<vmem>>, vector<32x32xf32>
    %cst_32 = arith.constant dense<0.000000e+00> : vector<8x32xf32>
    %43 = tpu.matmul %18, %42, %cst_32 {dimension_numbers = #tpu.dot_dimension_numbers<[1], [0], [0], [1], [0, 0, 1, 1], [], []>} : vector<8x32xf32>, vector<32x32xf32>, vector<8x32xf32> -> vector<8x32xf32>
    %c0_33 = arith.constant 0 : index
    %c0_34 = arith.constant 0 : index
    %44 = vector.load %arg13[%c0_33, %c0_34] : memref<1x32xf32, #tpu.memory_space<vmem>>, vector<1x32xf32>
    %45 = vector.broadcast %44 : vector<1x32xf32> to vector<8x32xf32>
    %46 = arith.addf %43, %45 : vector<8x32xf32>
    %47 = vector.shape_cast %46 : vector<8x32xf32> to vector<1x8x32xf32>
    %c0_35 = arith.constant 0 : index
    %c0_36 = arith.constant 0 : index
    %48 = vector.load %arg14[%c0_35, %c0_36] : memref<32x128xf32, #tpu.memory_space<vmem>>, vector<32x128xf32>
    %cst_37 = arith.constant dense<0.000000e+00> : vector<8x128xf32>
    %49 = tpu.matmul %18, %48, %cst_37 {dimension_numbers = #tpu.dot_dimension_numbers<[1], [0], [0], [1], [0, 0, 1, 1], [], []>} : vector<8x32xf32>, vector<32x128xf32>, vector<8x128xf32> -> vector<8x128xf32>
    %c0_38 = arith.constant 0 : index
    %c0_39 = arith.constant 0 : index
    %50 = vector.load %arg15[%c0_38, %c0_39] : memref<1x128xf32, #tpu.memory_space<vmem>>, vector<1x128xf32>
    %51 = vector.broadcast %50 : vector<1x128xf32> to vector<8x128xf32>
    %52 = arith.addf %49, %51 : vector<8x128xf32>
    %53 = vector.shape_cast %52 : vector<8x128xf32> to vector<1x8x128xf32>
    %c0_40 = arith.constant 0 : index
    %c0_41 = arith.constant 0 : index
    %54 = vector.load %arg10[%c0_40, %c0_41] : memref<32x32xf32, #tpu.memory_space<vmem>>, vector<32x32xf32>
    %cst_42 = arith.constant dense<0.000000e+00> : vector<8x32xf32>
    %55 = tpu.matmul %35, %54, %cst_42 {dimension_numbers = #tpu.dot_dimension_numbers<[1], [0], [0], [1], [0, 0, 1, 1], [], []>} : vector<8x32xf32>, vector<32x32xf32>, vector<8x32xf32> -> vector<8x32xf32>
    %c0_43 = arith.constant 0 : index
    %c0_44 = arith.constant 0 : index
    %56 = vector.load %arg11[%c0_43, %c0_44] : memref<1x32xf32, #tpu.memory_space<vmem>>, vector<1x32xf32>
    %57 = vector.broadcast %56 : vector<1x32xf32> to vector<8x32xf32>
    %58 = arith.addf %55, %57 : vector<8x32xf32>
    %59 = vector.shape_cast %58 : vector<8x32xf32> to vector<1x8x32xf32>
    %c0_45 = arith.constant 0 : index
    %c0_46 = arith.constant 0 : index
    %60 = vector.load %arg12[%c0_45, %c0_46] : memref<32x32xf32, #tpu.memory_space<vmem>>, vector<32x32xf32>
    %cst_47 = arith.constant dense<0.000000e+00> : vector<8x32xf32>
    %61 = tpu.matmul %35, %60, %cst_47 {dimension_numbers = #tpu.dot_dimension_numbers<[1], [0], [0], [1], [0, 0, 1, 1], [], []>} : vector<8x32xf32>, vector<32x32xf32>, vector<8x32xf32> -> vector<8x32xf32>
    %c0_48 = arith.constant 0 : index
    %c0_49 = arith.constant 0 : index
    %62 = vector.load %arg13[%c0_48, %c0_49] : memref<1x32xf32, #tpu.memory_space<vmem>>, vector<1x32xf32>
    %63 = vector.broadcast %62 : vector<1x32xf32> to vector<8x32xf32>
    %64 = arith.addf %61, %63 : vector<8x32xf32>
    %65 = vector.shape_cast %64 : vector<8x32xf32> to vector<1x8x32xf32>
    %c0_50 = arith.constant 0 : index
    %c0_51 = arith.constant 0 : index
    %66 = vector.load %arg14[%c0_50, %c0_51] : memref<32x128xf32, #tpu.memory_space<vmem>>, vector<32x128xf32>
    %cst_52 = arith.constant dense<0.000000e+00> : vector<8x128xf32>
    %67 = tpu.matmul %35, %66, %cst_52 {dimension_numbers = #tpu.dot_dimension_numbers<[1], [0], [0], [1], [0, 0, 1, 1], [], []>} : vector<8x32xf32>, vector<32x128xf32>, vector<8x128xf32> -> vector<8x128xf32>
    %c0_53 = arith.constant 0 : index
    %c0_54 = arith.constant 0 : index
    %68 = vector.load %arg15[%c0_53, %c0_54] : memref<1x128xf32, #tpu.memory_space<vmem>>, vector<1x128xf32>
    %69 = vector.broadcast %68 : vector<1x128xf32> to vector<8x128xf32>
    %70 = arith.addf %67, %69 : vector<8x128xf32>
    %71 = vector.shape_cast %70 : vector<8x128xf32> to vector<1x8x128xf32>
    "tpu.trace_start"() <{level = 10 : i32, message = "bqe,bke->bqk"}> : () -> ()
    %cst_55 = arith.constant dense<0.000000e+00> : vector<1x8x8xf32>
    %72 = tpu.matmul %41, %65, %cst_55 {dimension_numbers = #tpu.dot_dimension_numbers<[2], [2], [1], [1], [0, 0, 0, 1, 1, 1], [0], [0]>} : vector<1x8x32xf32>, vector<1x8x32xf32>, vector<1x8x8xf32> -> vector<1x8x8xf32>
    "tpu.trace_stop"() : () -> ()
    %cst_56 = arith.constant dense<0xFF800000> : vector<1x8xf32>
    %73 = vector.multi_reduction <maximumf>, %72, %cst_56 [2] : vector<1x8x8xf32> to vector<1x8xf32>
    %74 = vector.shape_cast %73 : vector<1x8xf32> to vector<1x8x1xf32>
    %75 = vector.broadcast %74 : vector<1x8x1xf32> to vector<1x8x8xf32>
    %76 = arith.subf %72, %75 : vector<1x8x8xf32>
    %77 = math.exp %76 : vector<1x8x8xf32>
    %cst_57 = arith.constant dense<0.000000e+00> : vector<1x8xf32>
    %78 = vector.multi_reduction <add>, %77, %cst_57 [2] : vector<1x8x8xf32> to vector<1x8xf32>
    %79 = vector.shape_cast %78 : vector<1x8xf32> to vector<1x8x1xf32>
    %80 = vector.broadcast %79 : vector<1x8x1xf32> to vector<1x8x8xf32>
    %81 = arith.divf %77, %80 : vector<1x8x8xf32>
    "tpu.trace_start"() <{level = 10 : i32, message = "bqk,bke->bqe"}> : () -> ()
    %cst_58 = arith.constant dense<0.000000e+00> : vector<1x8x128xf32>
    %82 = tpu.matmul %81, %71, %cst_58 {dimension_numbers = #tpu.dot_dimension_numbers<[2], [1], [1], [2], [0, 0, 0, 1, 1, 2], [0], [0]>} : vector<1x8x8xf32>, vector<1x8x128xf32>, vector<1x8x128xf32> -> vector<1x8x128xf32>
    "tpu.trace_stop"() : () -> ()
    "tpu.trace_start"() <{level = 10 : i32, message = "bqe,bke->bqk"}> : () -> ()
    %cst_59 = arith.constant dense<0.000000e+00> : vector<1x8x8xf32>
    %83 = tpu.matmul %59, %47, %cst_59 {dimension_numbers = #tpu.dot_dimension_numbers<[2], [2], [1], [1], [0, 0, 0, 1, 1, 1], [0], [0]>} : vector<1x8x32xf32>, vector<1x8x32xf32>, vector<1x8x8xf32> -> vector<1x8x8xf32>
    "tpu.trace_stop"() : () -> ()
    %cst_60 = arith.constant dense<0xFF800000> : vector<1x8xf32>
    %84 = vector.multi_reduction <maximumf>, %83, %cst_60 [2] : vector<1x8x8xf32> to vector<1x8xf32>
    %85 = vector.shape_cast %84 : vector<1x8xf32> to vector<1x8x1xf32>
    %86 = vector.broadcast %85 : vector<1x8x1xf32> to vector<1x8x8xf32>
    %87 = arith.subf %83, %86 : vector<1x8x8xf32>
    %88 = math.exp %87 : vector<1x8x8xf32>
    %cst_61 = arith.constant dense<0.000000e+00> : vector<1x8xf32>
    %89 = vector.multi_reduction <add>, %88, %cst_61 [2] : vector<1x8x8xf32> to vector<1x8xf32>
    %90 = vector.shape_cast %89 : vector<1x8xf32> to vector<1x8x1xf32>
    %91 = vector.broadcast %90 : vector<1x8x1xf32> to vector<1x8x8xf32>
    %92 = arith.divf %88, %91 : vector<1x8x8xf32>
    "tpu.trace_start"() <{level = 10 : i32, message = "bqk,bke->bqe"}> : () -> ()
    %cst_62 = arith.constant dense<0.000000e+00> : vector<1x8x128xf32>
    %93 = tpu.matmul %92, %53, %cst_62 {dimension_numbers = #tpu.dot_dimension_numbers<[2], [1], [1], [2], [0, 0, 0, 1, 1, 2], [0], [0]>} : vector<1x8x8xf32>, vector<1x8x128xf32>, vector<1x8x128xf32> -> vector<1x8x128xf32>
    "tpu.trace_stop"() : () -> ()
    %94 = arith.addf %82, %93 : vector<1x8x128xf32>
    %cst_63 = arith.constant 3.000000e-01 : f32
    %95 = vector.broadcast %cst_63 : f32 to vector<1x8x128xf32>
    %96 = arith.mulf %95, %94 : vector<1x8x128xf32>
    %c0_64 = arith.constant 0 : index
    %c0_65 = arith.constant 0 : index
    %c0_66 = arith.constant 0 : index
    %97 = vector.load %arg16[%c0_64, %c0_65, %c0_66] : memref<1x8x128xf32, #tpu.memory_space<vmem>>, vector<1x8x128xf32>
    tpu.vector_store %arg16[%c0_64, %c0_65, %c0_66], %96 {strides = array<i32>} : memref<1x8x128xf32, #tpu.memory_space<vmem>>, vector<1x8x128xf32>,
    return
  }
  func.func @transform_0(%arg0: i32) -> (i32, i32, i32) {
    %c0_i32 = arith.constant 0 : i32
    %c0_i32_0 = arith.constant 0 : i32
    %c0_i32_1 = arith.constant 0 : i32
    return %arg0, %c0_i32, %c0_i32_0 : i32, i32, i32
  }
  func.func @transform_1(%arg0: i32) -> (i32, i32) {
    %c0_i32 = arith.constant 0 : i32
    %c0_i32_0 = arith.constant 0 : i32
    %c0_i32_1 = arith.constant 0 : i32
    return %c0_i32, %c0_i32_0 : i32, i32
  }
  func.func @transform_2(%arg0: i32) -> (i32, i32) {
    %c0_i32 = arith.constant 0 : i32
    %c0_i32_0 = arith.constant 0 : i32
    %c0_i32_1 = arith.constant 0 : i32
    return %c0_i32, %c0_i32_0 : i32, i32
  }
  func.func @transform_3(%arg0: i32) -> (i32, i32) {
    %c0_i32 = arith.constant 0 : i32
    %c0_i32_0 = arith.constant 0 : i32
    %c0_i32_1 = arith.constant 0 : i32
    return %c0_i32, %c0_i32_0 : i32, i32
  }
  func.func @transform_4(%arg0: i32) -> (i32, i32) {
    %c0_i32 = arith.constant 0 : i32
    %c0_i32_0 = arith.constant 0 : i32
    %c0_i32_1 = arith.constant 0 : i32
    return %c0_i32, %c0_i32_0 : i32, i32
  }
  func.func @transform_5(%arg0: i32) -> (i32, i32) {
    %c0_i32 = arith.constant 0 : i32
    %c0_i32_0 = arith.constant 0 : i32
    %c0_i32_1 = arith.constant 0 : i32
    return %c0_i32, %c0_i32_0 : i32, i32
  }
  func.func @transform_6(%arg0: i32) -> (i32, i32) {
    %c0_i32 = arith.constant 0 : i32
    %c0_i32_0 = arith.constant 0 : i32
    %c0_i32_1 = arith.constant 0 : i32
    return %c0_i32, %c0_i32_0 : i32, i32
  }
  func.func @transform_7(%arg0: i32) -> (i32, i32) {
    %c0_i32 = arith.constant 0 : i32
    %c0_i32_0 = arith.constant 0 : i32
    %c0_i32_1 = arith.constant 0 : i32
    return %c0_i32, %c0_i32_0 : i32, i32
  }
  func.func @transform_8(%arg0: i32) -> (i32, i32) {
    %c0_i32 = arith.constant 0 : i32
    %c0_i32_0 = arith.constant 0 : i32
    %c0_i32_1 = arith.constant 0 : i32
    return %c0_i32, %c0_i32_0 : i32, i32
  }
  func.func @transform_9(%arg0: i32) -> (i32, i32) {
    %c0_i32 = arith.constant 0 : i32
    %c0_i32_0 = arith.constant 0 : i32
    %c0_i32_1 = arith.constant 0 : i32
    return %c0_i32, %c0_i32_0 : i32, i32
  }
  func.func @transform_10(%arg0: i32) -> (i32, i32) {
    %c0_i32 = arith.constant 0 : i32
    %c0_i32_0 = arith.constant 0 : i32
    %c0_i32_1 = arith.constant 0 : i32
    return %c0_i32, %c0_i32_0 : i32, i32
  }
  func.func @transform_11(%arg0: i32) -> (i32, i32) {
    %c0_i32 = arith.constant 0 : i32
    %c0_i32_0 = arith.constant 0 : i32
    %c0_i32_1 = arith.constant 0 : i32
    return %c0_i32, %c0_i32_0 : i32, i32
  }
  func.func @transform_12(%arg0: i32) -> (i32, i32) {
    %c0_i32 = arith.constant 0 : i32
    %c0_i32_0 = arith.constant 0 : i32
    %c0_i32_1 = arith.constant 0 : i32
    return %c0_i32, %c0_i32_0 : i32, i32
  }
  func.func @transform_13(%arg0: i32) -> (i32, i32) {
    %c0_i32 = arith.constant 0 : i32
    %c0_i32_0 = arith.constant 0 : i32
    %c0_i32_1 = arith.constant 0 : i32
    return %c0_i32, %c0_i32_0 : i32, i32
  }
  func.func @transform_14(%arg0: i32) -> (i32, i32) {
    %c0_i32 = arith.constant 0 : i32
    %c0_i32_0 = arith.constant 0 : i32
    %c0_i32_1 = arith.constant 0 : i32
    return %c0_i32, %c0_i32_0 : i32, i32
  }
  func.func @transform_15(%arg0: i32) -> (i32, i32, i32) {
    %c0_i32 = arith.constant 0 : i32
    %c0_i32_0 = arith.constant 0 : i32
    %c0_i32_1 = arith.constant 0 : i32
    return %arg0, %c0_i32, %c0_i32_0 : i32, i32, i32
  }
}

</mosaic_0001>

<llo_original>
// kernel: tpu_custom_call.1
$region0: #{tpu_custom_call.1}
  #allocation0 [shape = 'u32[]', space=smem, size = 0x4, offset = 0x4, fixed_abs, tag = 'smem constant byte address 0x4 - core index']
  #allocation1 [shape = 'u32[144,128]{1,0:T(1,128)}', space=vmem, size = 0x12000, scoped, tag = 'internal scratch']
  %s0 = inlined_call_operand.vmem [shape: f32[2,8,32], index: 0, kind: input, shape index: {}]
  %s1 = inlined_call_operand.vmem [shape: f32[32,64], index: 1, kind: input, shape index: {}]
  %s2 = inlined_call_operand.vmem [shape: f32[1,64], index: 2, kind: input, shape index: {}]
  %s3 = inlined_call_operand.vmem [shape: f32[64,32], index: 3, kind: input, shape index: {}]
  %s4 = inlined_call_operand.vmem [shape: f32[1,32], index: 4, kind: input, shape index: {}]
  %s5 = inlined_call_operand.vmem [shape: f32[32,96], index: 5, kind: input, shape index: {}]
  %s6 = inlined_call_operand.vmem [shape: f32[1,96], index: 6, kind: input, shape index: {}]
  %s7 = inlined_call_operand.vmem [shape: f32[96,32], index: 7, kind: input, shape index: {}]
  %s8 = inlined_call_operand.vmem [shape: f32[1,32], index: 8, kind: input, shape index: {}]
  %s9 = inlined_call_operand.vmem [shape: f32[32,32], index: 9, kind: input, shape index: {}]
  %s10 = inlined_call_operand.vmem [shape: f32[1,32], index: 10, kind: input, shape index: {}]
  %s11 = inlined_call_operand.vmem [shape: f32[32,32], index: 11, kind: input, shape index: {}]
  %s12 = inlined_call_operand.vmem [shape: f32[1,32], index: 12, kind: input, shape index: {}]
  %s13 = inlined_call_operand.vmem [shape: f32[32,128], index: 13, kind: input, shape index: {}]
  %s14 = inlined_call_operand.vmem [shape: f32[1,128], index: 14, kind: input, shape index: {}]
  %s15 = inlined_call_operand.hbm [shape: f32[2,8,128], index: 15, kind: output, shape index: {}]
  %s16 = sld [smem:[#allocation0]]
  $region93: #{tpu_custom_call.1} parent=0
    _
  %s18 = ssub.s32 1, %s16
  %s19 = scalar_select 0, %s18, %s16
  $region1: #{tpu_custom_call.1} parent=0
    #allocation2 [shape = 'u8[8192]{0}', space=vmem, size = 0x2000, scoped, tag = 'output window, operand 0']
    #allocation3 [shape = 's32[2]{0}', space=sflag, size = 0x8, scoped, tag = 'scoped memory for tpu_custom_call.1']
    %20 = vsyncpa [#allocation3], 0
    %s21 = scalar_lea.sflag [#allocation3], 1
    %22 = vsyncpa %s21, 0
    loop: start=0, step=1, limit=4
    $region2: #{tpu_custom_call.1} parent=1 // loop_pre_header
      _
    $region3: #{tpu_custom_call.1} parent=1 // loop_header
      %s24 = sphi 0, %s28
      %p25 = scmp.ge.s32.totalorder %s24, 4
      %s34 = sphi 0, %s36
      %s37 = sphi 0, %s34
      %s38 = sphi 0, %s37
      %s54 = sphi 0, %s38
      %s58 = sphi 0, %s58
      %s60 = sphi 0, %s58
      %s61 = sphi 0, %s60
      %s75 = sphi 0, %s61
      %s79 = sphi 0, %s79
      %s81 = sphi 0, %s79
      %s82 = sphi 0, %s81
      %s96 = sphi 0, %s82
      %s100 = sphi 0, %s100
      %s102 = sphi 0, %s100
      %s103 = sphi 0, %s102
      %s117 = sphi 0, %s103
      %s121 = sphi 0, %s121
      %s123 = sphi 0, %s121
      %s124 = sphi 0, %s123
      %s138 = sphi 0, %s124
      %s142 = sphi 0, %s142
      %s144 = sphi 0, %s142
      %s145 = sphi 0, %s144
      %s159 = sphi 0, %s145
      %s163 = sphi 0, %s163
      %s165 = sphi 0, %s163
      %s166 = sphi 0, %s165
      %s180 = sphi 0, %s166
      %s184 = sphi 0, %s184
      %s186 = sphi 0, %s184
      %s187 = sphi 0, %s186
      %s201 = sphi 0, %s187
      %s205 = sphi 0, %s205
      %s207 = sphi 0, %s205
      %s208 = sphi 0, %s207
      %s222 = sphi 0, %s208
      %s226 = sphi 0, %s226
      %s228 = sphi 0, %s226
      %s229 = sphi 0, %s228
      %s243 = sphi 0, %s229
      %s247 = sphi 0, %s247
      %s249 = sphi 0, %s247
      %s250 = sphi 0, %s249
      %s264 = sphi 0, %s250
      %s268 = sphi 0, %s268
      %s270 = sphi 0, %s268
      %s271 = sphi 0, %s270
      %s285 = sphi 0, %s271
      %s289 = sphi 0, %s289
      %s291 = sphi 0, %s289
      %s292 = sphi 0, %s291
      %s306 = sphi 0, %s292
      %s310 = sphi 0, %s310
      %s312 = sphi 0, %s310
      %s313 = sphi 0, %s312
      %s327 = sphi 0, %s313
      %s331 = sphi 0, %s331
      %s333 = sphi 0, %s331
      %s334 = sphi 0, %s333
      %s348 = sphi 0, %s334
      %s354 = sphi 0, %s356
      %s357 = sphi 0, %s354
      %s358 = sphi 0, %s357
      %s374 = sphi 0, %s358
    $region4: #{tpu_custom_call.1} parent=1 // loop_header_branch
      %27 = sbr.rel (%p25) target = $region8
    $region5: #{tpu_custom_call.1} parent=1 // loop_body
      %s29 = ssub.s32 %s24, 1
      %s30 = ssub.s32 %s24, 2
      %s31 = sadd.s32 %s24, 1
      %s32 = ssub.s32 %s24, %s31
      %p33 = scmp.eq.s32.totalorder %s32, 0
      %s35 = sadd.s32 %s34, 1
      %s36 = scalar_select %p33, %s34, %s35
      %p39 = pneg %p33
      %p40 = scmp.eq.s32.totalorder %s24, 1
      %p41 = por %p39, %p40
      %p42 = scmp.ne.s32.totalorder %s34, %s37
      %p43 = scmp.eq.s32.totalorder %s24, 0
      %p44 = por %p42, %p43
      %p45 = scmp.ne.s32.totalorder %s34, %s37
      %p46 = scmp.eq.s32.totalorder %s29, 1
      %p47 = por %p45, %p46
      %p48 = scmp.ne.s32.totalorder %s37, %s38
      %p49 = scmp.eq.s32.totalorder %s29, 0
      %p50 = por %p48, %p49
      %p51 = scmp.ne.s32.totalorder %s37, %s38
      %p52 = scmp.eq.s32.totalorder %s30, 1
      %p53 = por %p51, %p52
      %p55 = scmp.ne.s32.totalorder %s38, %s54
      %p56 = scmp.eq.s32.totalorder %s30, 0
      %p57 = por %p55, %p56
      %s59 = sadd.s32 %s58, 1
      %p62 = scmp.eq.s32.totalorder %s24, 1
      %p63 = scmp.ne.s32.totalorder %s58, %s60
      %p64 = scmp.eq.s32.totalorder %s24, 0
      %p65 = por %p63, %p64
      %p66 = scmp.ne.s32.totalorder %s58, %s60
      %p67 = scmp.eq.s32.totalorder %s29, 1
      %p68 = por %p66, %p67
      %p69 = scmp.ne.s32.totalorder %s60, %s61
      %p70 = scmp.eq.s32.totalorder %s29, 0
      %p71 = por %p69, %p70
      %p72 = scmp.ne.s32.totalorder %s60, %s61
      %p73 = scmp.eq.s32.totalorder %s30, 1
      %p74 = por %p72, %p73
      %p76 = scmp.ne.s32.totalorder %s61, %s75
      %p77 = scmp.eq.s32.totalorder %s30, 0
      %p78 = por %p76, %p77
      %s80 = sadd.s32 %s79, 1
      %p83 = scmp.eq.s32.totalorder %s24, 1
      %p84 = scmp.ne.s32.totalorder %s79, %s81
      %p85 = scmp.eq.s32.totalorder %s24, 0
      %p86 = por %p84, %p85
      %p87 = scmp.ne.s32.totalorder %s79, %s81
      %p88 = scmp.eq.s32.totalorder %s29, 1
      %p89 = por %p87, %p88
      %p90 = scmp.ne.s32.totalorder %s81, %s82
      %p91 = scmp.eq.s32.totalorder %s29, 0
      %p92 = por %p90, %p91
      %p93 = scmp.ne.s32.totalorder %s81, %s82
      %p94 = scmp.eq.s32.totalorder %s30, 1
      %p95 = por %p93, %p94
      %p97 = scmp.ne.s32.totalorder %s82, %s96
      %p98 = scmp.eq.s32.totalorder %s30, 0
      %p99 = por %p97, %p98
      %s101 = sadd.s32 %s100, 1
      %p104 = scmp.eq.s32.totalorder %s24, 1
      %p105 = scmp.ne.s32.totalorder %s100, %s102
      %p106 = scmp.eq.s32.totalorder %s24, 0
      %p107 = por %p105, %p106
      %p108 = scmp.ne.s32.totalorder %s100, %s102
      %p109 = scmp.eq.s32.totalorder %s29, 1
      %p110 = por %p108, %p109
      %p111 = scmp.ne.s32.totalorder %s102, %s103
      %p112 = scmp.eq.s32.totalorder %s29, 0
      %p113 = por %p111, %p112
      %p114 = scmp.ne.s32.totalorder %s102, %s103
      %p115 = scmp.eq.s32.totalorder %s30, 1
      %p116 = por %p114, %p115
      %p118 = scmp.ne.s32.totalorder %s103, %s117
      %p119 = scmp.eq.s32.totalorder %s30, 0
      %p120 = por %p118, %p119
      %s122 = sadd.s32 %s121, 1
      %p125 = scmp.eq.s32.totalorder %s24, 1
      %p126 = scmp.ne.s32.totalorder %s121, %s123
      %p127 = scmp.eq.s32.totalorder %s24, 0
      %p128 = por %p126, %p127
      %p129 = scmp.ne.s32.totalorder %s121, %s123
      %p130 = scmp.eq.s32.totalorder %s29, 1
      %p131 = por %p129, %p130
      %p132 = scmp.ne.s32.totalorder %s123, %s124
      %p133 = scmp.eq.s32.totalorder %s29, 0
      %p134 = por %p132, %p133
      %p135 = scmp.ne.s32.totalorder %s123, %s124
      %p136 = scmp.eq.s32.totalorder %s30, 1
      %p137 = por %p135, %p136
      %p139 = scmp.ne.s32.totalorder %s124, %s138
      %p140 = scmp.eq.s32.totalorder %s30, 0
      %p141 = por %p139, %p140
      %s143 = sadd.s32 %s142, 1
      %p146 = scmp.eq.s32.totalorder %s24, 1
      %p147 = scmp.ne.s32.totalorder %s142, %s144
      %p148 = scmp.eq.s32.totalorder %s24, 0
      %p149 = por %p147, %p148
      %p150 = scmp.ne.s32.totalorder %s142, %s144
      %p151 = scmp.eq.s32.totalorder %s29, 1
      %p152 = por %p150, %p151
      %p153 = scmp.ne.s32.totalorder %s144, %s145
      %p154 = scmp.eq.s32.totalorder %s29, 0
      %p155 = por %p153, %p154
      %p156 = scmp.ne.s32.totalorder %s144, %s145
      %p157 = scmp.eq.s32.totalorder %s30, 1
      %p158 = por %p156, %p157
      %p160 = scmp.ne.s32.totalorder %s145, %s159
      %p161 = scmp.eq.s32.totalorder %s30, 0
      %p162 = por %p160, %p161
      %s164 = sadd.s32 %s163, 1
      %p167 = scmp.eq.s32.totalorder %s24, 1
      %p168 = scmp.ne.s32.totalorder %s163, %s165
      %p169 = scmp.eq.s32.totalorder %s24, 0
      %p170 = por %p168, %p169
      %p171 = scmp.ne.s32.totalorder %s163, %s165
      %p172 = scmp.eq.s32.totalorder %s29, 1
      %p173 = por %p171, %p172
      %p174 = scmp.ne.s32.totalorder %s165, %s166
      %p175 = scmp.eq.s32.totalorder %s29, 0
      %p176 = por %p174, %p175
      %p177 = scmp.ne.s32.totalorder %s165, %s166
      %p178 = scmp.eq.s32.totalorder %s30, 1
      %p179 = por %p177, %p178
      %p181 = scmp.ne.s32.totalorder %s166, %s180
      %p182 = scmp.eq.s32.totalorder %s30, 0
      %p183 = por %p181, %p182
      %s185 = sadd.s32 %s184, 1
      %p188 = scmp.eq.s32.totalorder %s24, 1
      %p189 = scmp.ne.s32.totalorder %s184, %s186
      %p190 = scmp.eq.s32.totalorder %s24, 0
      %p191 = por %p189, %p190
      %p192 = scmp.ne.s32.totalorder %s184, %s186
      %p193 = scmp.eq.s32.totalorder %s29, 1
      %p194 = por %p192, %p193
      %p195 = scmp.ne.s32.totalorder %s186, %s187
      %p196 = scmp.eq.s32.totalorder %s29, 0
      %p197 = por %p195, %p196
      %p198 = scmp.ne.s32.totalorder %s186, %s187
      %p199 = scmp.eq.s32.totalorder %s30, 1
      %p200 = por %p198, %p199
      %p202 = scmp.ne.s32.totalorder %s187, %s201
      %p203 = scmp.eq.s32.totalorder %s30, 0
      %p204 = por %p202, %p203
      %s206 = sadd.s32 %s205, 1
      %p209 = scmp.eq.s32.totalorder %s24, 1
      %p210 = scmp.ne.s32.totalorder %s205, %s207
      %p211 = scmp.eq.s32.totalorder %s24, 0
      %p212 = por %p210, %p211
      %p213 = scmp.ne.s32.totalorder %s205, %s207
      %p214 = scmp.eq.s32.totalorder %s29, 1
      %p215 = por %p213, %p214
      %p216 = scmp.ne.s32.totalorder %s207, %s208
      %p217 = scmp.eq.s32.totalorder %s29, 0
      %p218 = por %p216, %p217
      %p219 = scmp.ne.s32.totalorder %s207, %s208
      %p220 = scmp.eq.s32.totalorder %s30, 1
      %p221 = por %p219, %p220
      %p223 = scmp.ne.s32.totalorder %s208, %s222
      %p224 = scmp.eq.s32.totalorder %s30, 0
      %p225 = por %p223, %p224
      %s227 = sadd.s32 %s226, 1
      %p230 = scmp.eq.s32.totalorder %s24, 1
      %p231 = scmp.ne.s32.totalorder %s226, %s228
      %p232 = scmp.eq.s32.totalorder %s24, 0
      %p233 = por %p231, %p232
      %p234 = scmp.ne.s32.totalorder %s226, %s228
      %p235 = scmp.eq.s32.totalorder %s29, 1
      %p236 = por %p234, %p235
      %p237 = scmp.ne.s32.totalorder %s228, %s229
      %p238 = scmp.eq.s32.totalorder %s29, 0
      %p239 = por %p237, %p238
      %p240 = scmp.ne.s32.totalorder %s228, %s229
      %p241 = scmp.eq.s32.totalorder %s30, 1
      %p242 = por %p240, %p241
      %p244 = scmp.ne.s32.totalorder %s229, %s243
      %p245 = scmp.eq.s32.totalorder %s30, 0
      %p246 = por %p244, %p245
      %s248 = sadd.s32 %s247, 1
      %p251 = scmp.eq.s32.totalorder %s24, 1
      %p252 = scmp.ne.s32.totalorder %s247, %s249
      %p253 = scmp.eq.s32.totalorder %s24, 0
      %p254 = por %p252, %p253
      %p255 = scmp.ne.s32.totalorder %s247, %s249
      %p256 = scmp.eq.s32.totalorder %s29, 1
      %p257 = por %p255, %p256
      %p258 = scmp.ne.s32.totalorder %s249, %s250
      %p259 = scmp.eq.s32.totalorder %s29, 0
      %p260 = por %p258, %p259
      %p261 = scmp.ne.s32.totalorder %s249, %s250
      %p262 = scmp.eq.s32.totalorder %s30, 1
      %p263 = por %p261, %p262
      %p265 = scmp.ne.s32.totalorder %s250, %s264
      %p266 = scmp.eq.s32.totalorder %s30, 0
      %p267 = por %p265, %p266
      %s269 = sadd.s32 %s268, 1
      %p272 = scmp.eq.s32.totalorder %s24, 1
      %p273 = scmp.ne.s32.totalorder %s268, %s270
      %p274 = scmp.eq.s32.totalorder %s24, 0
      %p275 = por %p273, %p274
      %p276 = scmp.ne.s32.totalorder %s268, %s270
      %p277 = scmp.eq.s32.totalorder %s29, 1
      %p278 = por %p276, %p277
      %p279 = scmp.ne.s32.totalorder %s270, %s271
      %p280 = scmp.eq.s32.totalorder %s29, 0
      %p281 = por %p279, %p280
      %p282 = scmp.ne.s32.totalorder %s270, %s271
      %p283 = scmp.eq.s32.totalorder %s30, 1
      %p284 = por %p282, %p283
      %p286 = scmp.ne.s32.totalorder %s271, %s285
      %p287 = scmp.eq.s32.totalorder %s30, 0
      %p288 = por %p286, %p287
      %s290 = sadd.s32 %s289, 1
      %p293 = scmp.eq.s32.totalorder %s24, 1
      %p294 = scmp.ne.s32.totalorder %s289, %s291
      %p295 = scmp.eq.s32.totalorder %s24, 0
      %p296 = por %p294, %p295
      %p297 = scmp.ne.s32.totalorder %s289, %s291
      %p298 = scmp.eq.s32.totalorder %s29, 1
      %p299 = por %p297, %p298
      %p300 = scmp.ne.s32.totalorder %s291, %s292
      %p301 = scmp.eq.s32.totalorder %s29, 0
      %p302 = por %p300, %p301
      %p303 = scmp.ne.s32.totalorder %s291, %s292
      %p304 = scmp.eq.s32.totalorder %s30, 1
      %p305 = por %p303, %p304
      %p307 = scmp.ne.s32.totalorder %s292, %s306
      %p308 = scmp.eq.s32.totalorder %s30, 0
      %p309 = por %p307, %p308
      %s311 = sadd.s32 %s310, 1
      %p314 = scmp.eq.s32.totalorder %s24, 1
      %p315 = scmp.ne.s32.totalorder %s310, %s312
      %p316 = scmp.eq.s32.totalorder %s24, 0
      %p317 = por %p315, %p316
      %p318 = scmp.ne.s32.totalorder %s310, %s312
      %p319 = scmp.eq.s32.totalorder %s29, 1
      %p320 = por %p318, %p319
      %p321 = scmp.ne.s32.totalorder %s312, %s313
      %p322 = scmp.eq.s32.totalorder %s29, 0
      %p323 = por %p321, %p322
      %p324 = scmp.ne.s32.totalorder %s312, %s313
      %p325 = scmp.eq.s32.totalorder %s30, 1
      %p326 = por %p324, %p325
      %p328 = scmp.ne.s32.totalorder %s313, %s327
      %p329 = scmp.eq.s32.totalorder %s30, 0
      %p330 = por %p328, %p329
      %s332 = sadd.s32 %s331, 1
      %p335 = scmp.eq.s32.totalorder %s24, 1
      %p336 = scmp.ne.s32.totalorder %s331, %s333
      %p337 = scmp.eq.s32.totalorder %s24, 0
      %p338 = por %p336, %p337
      %p339 = scmp.ne.s32.totalorder %s331, %s333
      %p340 = scmp.eq.s32.totalorder %s29, 1
      %p341 = por %p339, %p340
      %p342 = scmp.ne.s32.totalorder %s333, %s334
      %p343 = scmp.eq.s32.totalorder %s29, 0
      %p344 = por %p342, %p343
      %p345 = scmp.ne.s32.totalorder %s333, %s334
      %p346 = scmp.eq.s32.totalorder %s30, 1
      %p347 = por %p345, %p346
      %p349 = scmp.ne.s32.totalorder %s334, %s348
      %p350 = scmp.eq.s32.totalorder %s30, 0
      %p351 = por %p349, %p350
      %s352 = ssub.s32 %s24, %s31
      %p353 = scmp.eq.s32.totalorder %s352, 0
      %s355 = sadd.s32 %s354, 1
      %s356 = scalar_select %p353, %s354, %s355
      %p359 = pneg %p353
      %p360 = scmp.eq.s32.totalorder %s24, 1
      %p361 = por %p359, %p360
      %p362 = scmp.ne.s32.totalorder %s354, %s357
      %p363 = scmp.eq.s32.totalorder %s24, 0
      %p364 = por %p362, %p363
      %p365 = scmp.ne.s32.totalorder %s354, %s357
      %p366 = scmp.eq.s32.totalorder %s29, 1
      %p367 = por %p365, %p366
      %p368 = scmp.ne.s32.totalorder %s357, %s358
      %p369 = scmp.eq.s32.totalorder %s29, 0
      %p370 = por %p368, %p369
      %p371 = scmp.ne.s32.totalorder %s357, %s358
      %p372 = scmp.eq.s32.totalorder %s30, 1
      %p373 = por %p371, %p372
      %p375 = scmp.ne.s32.totalorder %s358, %s374
      %p376 = scmp.eq.s32.totalorder %s30, 0
      %p377 = por %p375, %p376
      %p378 = scmp.le.s32.totalorder 1, %s24
      %p379 = scmp.lt.s32.totalorder %s24, 3
      %p380 = pnand %p378, %p379
      %p381 = pneg %p380
      // Predicated region
      $region9: #{tpu_custom_call.1} parent=5 // pred_check
        _
      $region10: #{tpu_custom_call.1} parent=5 // pred_check_branch
        %383 = sbr.rel (%p380) target = $region12
      $region11: #{tpu_custom_call.1} parent=5 // pred_region
        %s384 = ssub.s32 %s24, 1
        // Predicated region
        $region13: #{tpu_custom_call.1} parent=11 // pred_check
          %p385 = pneg %p71
        $region14: #{tpu_custom_call.1} parent=11 // pred_check_branch
          %387 = sbr.rel (%p385) target = $region16
        $region15: #{tpu_custom_call.1} parent=11 // pred_region
          _
        $region16: #{tpu_custom_call.1} parent=11 // pred_fallthru
          _
        // Predicated region
        $region17: #{tpu_custom_call.1} parent=11 // pred_check
          %p388 = pneg %p92
        $region18: #{tpu_custom_call.1} parent=11 // pred_check_branch
          %390 = sbr.rel (%p388) target = $region20
        $region19: #{tpu_custom_call.1} parent=11 // pred_region
          _
        $region20: #{tpu_custom_call.1} parent=11 // pred_fallthru
          _
        // Predicated region
        $region21: #{tpu_custom_call.1} parent=11 // pred_check
          %p391 = pneg %p113
        $region22: #{tpu_custom_call.1} parent=11 // pred_check_branch
          %393 = sbr.rel (%p391) target = $region24
        $region23: #{tpu_custom_call.1} parent=11 // pred_region
          _
        $region24: #{tpu_custom_call.1} parent=11 // pred_fallthru
          _
        // Predicated region
        $region25: #{tpu_custom_call.1} parent=11 // pred_check
          %p394 = pneg %p134
        $region26: #{tpu_custom_call.1} parent=11 // pred_check_branch
          %396 = sbr.rel (%p394) target = $region28
        $region27: #{tpu_custom_call.1} parent=11 // pred_region
          _
        $region28: #{tpu_custom_call.1} parent=11 // pred_fallthru
          _
        // Predicated region
        $region29: #{tpu_custom_call.1} parent=11 // pred_check
          %p397 = pneg %p155
        $region30: #{tpu_custom_call.1} parent=11 // pred_check_branch
          %399 = sbr.rel (%p397) target = $region32
        $region31: #{tpu_custom_call.1} parent=11 // pred_region
          _
        $region32: #{tpu_custom_call.1} parent=11 // pred_fallthru
          _
        // Predicated region
        $region33: #{tpu_custom_call.1} parent=11 // pred_check
          %p400 = pneg %p176
        $region34: #{tpu_custom_call.1} parent=11 // pred_check_branch
          %402 = sbr.rel (%p400) target = $region36
        $region35: #{tpu_custom_call.1} parent=11 // pred_region
          _
        $region36: #{tpu_custom_call.1} parent=11 // pred_fallthru
          _
        // Predicated region
        $region37: #{tpu_custom_call.1} parent=11 // pred_check
          %p403 = pneg %p197
        $region38: #{tpu_custom_call.1} parent=11 // pred_check_branch
          %405 = sbr.rel (%p403) target = $region40
        $region39: #{tpu_custom_call.1} parent=11 // pred_region
          _
        $region40: #{tpu_custom_call.1} parent=11 // pred_fallthru
          _
        // Predicated region
        $region41: #{tpu_custom_call.1} parent=11 // pred_check
          %p406 = pneg %p218
        $region42: #{tpu_custom_call.1} parent=11 // pred_check_branch
          %408 = sbr.rel (%p406) target = $region44
        $region43: #{tpu_custom_call.1} parent=11 // pred_region
          _
        $region44: #{tpu_custom_call.1} parent=11 // pred_fallthru
          _
        // Predicated region
        $region45: #{tpu_custom_call.1} parent=11 // pred_check
          %p409 = pneg %p239
        $region46: #{tpu_custom_call.1} parent=11 // pred_check_branch
          %411 = sbr.rel (%p409) target = $region48
        $region47: #{tpu_custom_call.1} parent=11 // pred_region
          _
        $region48: #{tpu_custom_call.1} parent=11 // pred_fallthru
          _
        // Predicated region
        $region49: #{tpu_custom_call.1} parent=11 // pred_check
          %p412 = pneg %p260
        $region50: #{tpu_custom_call.1} parent=11 // pred_check_branch
          %414 = sbr.rel (%p412) target = $region52
        $region51: #{tpu_custom_call.1} parent=11 // pred_region
          _
        $region52: #{tpu_custom_call.1} parent=11 // pred_fallthru
          _
        // Predicated region
        $region53: #{tpu_custom_call.1} parent=11 // pred_check
          %p415 = pneg %p281
        $region54: #{tpu_custom_call.1} parent=11 // pred_check_branch
          %417 = sbr.rel (%p415) target = $region56
        $region55: #{tpu_custom_call.1} parent=11 // pred_region
          _
        $region56: #{tpu_custom_call.1} parent=11 // pred_fallthru
          _
        // Predicated region
        $region57: #{tpu_custom_call.1} parent=11 // pred_check
          %p418 = pneg %p302
        $region58: #{tpu_custom_call.1} parent=11 // pred_check_branch
          %420 = sbr.rel (%p418) target = $region60
        $region59: #{tpu_custom_call.1} parent=11 // pred_region
          _
        $region60: #{tpu_custom_call.1} parent=11 // pred_fallthru
          _
        // Predicated region
        $region61: #{tpu_custom_call.1} parent=11 // pred_check
          %p421 = pneg %p323
        $region62: #{tpu_custom_call.1} parent=11 // pred_check_branch
          %423 = sbr.rel (%p421) target = $region64
        $region63: #{tpu_custom_call.1} parent=11 // pred_region
          _
        $region64: #{tpu_custom_call.1} parent=11 // pred_fallthru
          _
        // Predicated region
        $region65: #{tpu_custom_call.1} parent=11 // pred_check
          %p424 = pneg %p344
        $region66: #{tpu_custom_call.1} parent=11 // pred_check_branch
          %426 = sbr.rel (%p424) target = $region68
        $region67: #{tpu_custom_call.1} parent=11 // pred_region
          _
        $region68: #{tpu_custom_call.1} parent=11 // pred_fallthru
          _
      $region12: #{tpu_custom_call.1} parent=5 // pred_fallthru
        _
      %p427 = scmp.lt.s32.totalorder %s24, 2
      // Predicated region
      $region69: #{tpu_custom_call.1} parent=5 // pred_check
        %p428 = pneg %p427
      $region70: #{tpu_custom_call.1} parent=5 // pred_check_branch
        %430 = sbr.rel (%p428) target = $region72
      $region71: #{tpu_custom_call.1} parent=5 // pred_region
        // Predicated region
        $region73: #{tpu_custom_call.1} parent=71 // pred_check
          %p431 = pneg %p44
        $region74: #{tpu_custom_call.1} parent=71 // pred_check_branch
          %433 = sbr.rel (%p431) target = $region76
        $region75: #{tpu_custom_call.1} parent=71 // pred_region
          %p434 = scmp.lt.s32.totalorder %s24, 1
          %s435 = scalar_select %p434, %s24, 1
          %s436 = smul.addr %s435, 8
          %s437 = scalar_lea.vmem %s0, %s436
        $region76: #{tpu_custom_call.1} parent=71 // pred_fallthru
          _
      $region72: #{tpu_custom_call.1} parent=5 // pred_fallthru
        _
      %p438 = scmp.le.s32.totalorder 1, %s24
      %p439 = scmp.lt.s32.totalorder %s24, 3
      %p440 = pnand %p438, %p439
      %p441 = pneg %p440
      // Predicated region
      $region77: #{tpu_custom_call.1} parent=5 // pred_check
        _
      $region78: #{tpu_custom_call.1} parent=5 // pred_check_branch
        %443 = sbr.rel (%p440) target = $region80
      $region79: #{tpu_custom_call.1} parent=5 // pred_region
        %s444 = ssub.s32 %s24, 1
        %p445 = scmp.lt.s32.totalorder %s29, 1
        %s446 = scalar_select %p445, %s29, 1
        %s447 = smul.addr %s446, 8
        %s448 = scalar_lea.vmem %s0, %s447
        %p449 = pneg %p50
        %p450 = pneg %p47
        %p451 = pneg %p71
        %p452 = pneg %p68
        %p453 = pneg %p92
        %p454 = pneg %p89
        %p455 = pneg %p113
        %p456 = pneg %p110
        %p457 = pneg %p134
        %p458 = pneg %p131
        %p459 = pneg %p155
        %p460 = pneg %p152
        %p461 = pneg %p176
        %p462 = pneg %p173
        %p463 = pneg %p197
        %p464 = pneg %p194
        %p465 = pneg %p218
        %p466 = pneg %p215
        %p467 = pneg %p239
        %p468 = pneg %p236
        %p469 = pneg %p260
        %p470 = pneg %p257
        %p471 = pneg %p281
        %p472 = pneg %p278
        %p473 = pneg %p302
        %p474 = pneg %p299
        %p475 = pneg %p323
        %p476 = pneg %p320
        %p477 = pneg %p344
        %p478 = pneg %p341
        %p479 = pneg %p370
        %p480 = pneg %p367
        %s481 = sand.u32 %s357, 1
        %s482 = scalar_lea.sflag [#allocation3], %s481
        %s483 = sand.u32 %s357, 1
        %s484 = smul.addr %s483, 8
        %s485 = scalar_lea.vmem [#allocation2], %s484
        %p486 = scmp.lt.s32.totalorder %s29, 1
        %s487 = scalar_select %p486, %s29, 1
        %s488 = smul.addr %s487, 8
        %s489 = scalar_lea.vmem %s0, %s488
        %v490 = vld [vmem:[%s489] sm:$0xff]
        %v491 = vld [vmem:[%s1] sm:$0xff]
        %v492 = vld [vmem:[%s1 + $0x8] sm:$0xff]
        %v493 = vld [vmem:[%s1 + $0x10] sm:$0xff]
        %v494 = vld [vmem:[%s1 + $0x18] sm:$0xff]
        %v495 = vld [vmem:[%s2] sm:$0x1]
        %v497 = vlaneseq
        %v498 = vshrl.u32 %v497, 7
        %v499 = vsub.s32 0, %v498
        %v500 = vrot.slane %v495, %v499
        %vm502 = vcmask 261120
        %v504 = vsel %vm502, %v490, 0
        %506 = vmatprep.subr.mxu0 0.0
        %507 = vmatpush1.msra.mxu0 0.0
        %508 = vmatprep.subr.mxu0 0.0
        %509 = vmatpush1.msra.mxu0 0.0
        %510 = vmatprep.subr.mxu0 0.0
        %511 = vmatpush1.msra.mxu0 0.0
        %512 = vmatprep.subr.mxu0 0.0
        %513 = vmatpush1.msra.mxu0 0.0
        %514 = vmatprep.subr.mxu0 0.0
        %515 = vmatpush1.msra.mxu0 0.0
        %516 = vmatprep.subr.mxu0 0.0
        %517 = vmatpush1.msra.mxu0 0.0
        %518 = vmatprep.subr.mxu0 0.0
        %519 = vmatpush1.msra.mxu0 0.0
        %520 = vmatprep.subr.mxu0 0.0
        %521 = vmatpush1.msra.mxu0 0.0
        %522 = vmatprep.subr.mxu0 0.0
        %523 = vmatpush1.msra.mxu0 0.0
        %524 = vmatprep.subr.mxu0 0.0
        %525 = vmatpush1.msra.mxu0 0.0
        %526 = vmatprep.subr.mxu0 0.0
        %527 = vmatpush1.msra.mxu0 0.0
        %528 = vmatprep.subr.mxu0 0.0
        %529 = vmatpush1.msra.mxu0 0.0
        %530 = vmatprep.subr.mxu0 0.0
        %531 = vmatpush1.msra.mxu0 %v494
        %532 = vmatprep.subr.mxu0 0.0
        %533 = vmatpush1.msra.mxu0 %v493
        %534 = vmatprep.subr.mxu0 0.0
        %535 = vmatpush1.msra.mxu0 %v492
        %536 = vmatprep.subr.mxu0 0.0
        %537 = vmatpush1.msra.mxu0 %v491
        %538 = vmatprep.subr.mxu0 0.0
        %539 = vmatpush2.msra.mxu0 0.0
        %540 = vmatprep.subr.mxu0 0.0
        %541 = vmatpush2.msra.mxu0 0.0
        %542 = vmatprep.subr.mxu0 0.0
        %543 = vmatpush2.msra.mxu0 0.0
        %544 = vmatprep.subr.mxu0 0.0
        %545 = vmatpush2.msra.mxu0 0.0
        %546 = vmatprep.subr.mxu0 0.0
        %547 = vmatpush2.msra.mxu0 0.0
        %548 = vmatprep.subr.mxu0 0.0
        %549 = vmatpush2.msra.mxu0 0.0
        %550 = vmatprep.subr.mxu0 0.0
        %551 = vmatpush2.msra.mxu0 0.0
        %552 = vmatprep.subr.mxu0 0.0
        %553 = vmatpush2.msra.mxu0 0.0
        %554 = vmatprep.subr.mxu0 0.0
        %555 = vmatpush2.msra.mxu0 0.0
        %556 = vmatprep.subr.mxu0 0.0
        %557 = vmatpush2.msra.mxu0 0.0
        %558 = vmatprep.subr.mxu0 0.0
        %559 = vmatpush2.msra.mxu0 0.0
        %560 = vmatprep.subr.mxu0 0.0
        %561 = vmatpush2.msra.mxu0 0.0
        %562 = vmatprep.subr.mxu0 0.0
        %563 = vmatpush2.msra.mxu0 0.0
        %564 = vmatprep.subr.mxu0 0.0
        %565 = vmatpush2.msra.mxu0 0.0
        %566 = vmatprep.subr.mxu0 0.0
        %567 = vmatpush2.msra.mxu0 0.0
        %568 = vmatprep.subr.mxu0 0.0
        %569 = vmatpush2.msra.mxu0 0.0
        %570 = vmatprep.mubr.f32.mxu0 0.0
        %571 = vmatmul.mubr.f32.gmra.mxu0 %v504
        %v572 = vpop.f32.mrf.mxu0
        %v573 = vadd.f32 %v500, %v572
        %v574 = vpop.f32.mrf.mxu0
        %575 = vdwg.mxu0
        %v576 = vmax.f32 %v573, 0.0
        %v577 = vld [vmem:[%s3] sm:$0xff]
        %v578 = vld [vmem:[%s3 + $0x8] sm:$0xff]
        %v579 = vld [vmem:[%s3 + $0x10] sm:$0xff]
        %v580 = vld [vmem:[%s3 + $0x18] sm:$0xff]
        %v581 = vld [vmem:[%s3 + $0x20] sm:$0xff]
        %v582 = vld [vmem:[%s3 + $0x28] sm:$0xff]
        %v583 = vld [vmem:[%s3 + $0x30] sm:$0xff]
        %v584 = vld [vmem:[%s3 + $0x38] sm:$0xff]
        %v585 = vld [vmem:[%s4] sm:$0x1]
        %v587 = vlaneseq
        %v588 = vshrl.u32 %v587, 7
        %v589 = vsub.s32 0, %v588
        %v590 = vrot.slane %v585, %v589
        %vm592 = vcmask 523264
        %v594 = vsel %vm592, %v576, 0
        %596 = vmatprep.subr.mxu0 0.0
        %597 = vmatpush1.msra.mxu0 0.0
        %598 = vmatprep.subr.mxu0 0.0
        %599 = vmatpush1.msra.mxu0 0.0
        %600 = vmatprep.subr.mxu0 0.0
        %601 = vmatpush1.msra.mxu0 0.0
        %602 = vmatprep.subr.mxu0 0.0
        %603 = vmatpush1.msra.mxu0 0.0
        %604 = vmatprep.subr.mxu0 0.0
        %605 = vmatpush1.msra.mxu0 0.0
        %606 = vmatprep.subr.mxu0 0.0
        %607 = vmatpush1.msra.mxu0 0.0
        %608 = vmatprep.subr.mxu0 0.0
        %609 = vmatpush1.msra.mxu0 0.0
        %610 = vmatprep.subr.mxu0 0.0
        %611 = vmatpush1.msra.mxu0 0.0
        %612 = vmatprep.subr.mxu0 0.0
        %613 = vmatpush1.msra.mxu0 %v584
        %614 = vmatprep.subr.mxu0 0.0
        %615 = vmatpush1.msra.mxu0 %v583
        %616 = vmatprep.subr.mxu0 0.0
        %617 = vmatpush1.msra.mxu0 %v582
        %618 = vmatprep.subr.mxu0 0.0
        %619 = vmatpush1.msra.mxu0 %v581
        %620 = vmatprep.subr.mxu0 0.0
        %621 = vmatpush1.msra.mxu0 %v580
        %622 = vmatprep.subr.mxu0 0.0
        %623 = vmatpush1.msra.mxu0 %v579
        %624 = vmatprep.subr.mxu0 0.0
        %625 = vmatpush1.msra.mxu0 %v578
        %626 = vmatprep.subr.mxu0 0.0
        %627 = vmatpush1.msra.mxu0 %v577
        %628 = vmatprep.subr.mxu0 0.0
        %629 = vmatpush2.msra.mxu0 0.0
        %630 = vmatprep.subr.mxu0 0.0
        %631 = vmatpush2.msra.mxu0 0.0
        %632 = vmatprep.subr.mxu0 0.0
        %633 = vmatpush2.msra.mxu0 0.0
        %634 = vmatprep.subr.mxu0 0.0
        %635 = vmatpush2.msra.mxu0 0.0
        %636 = vmatprep.subr.mxu0 0.0
        %637 = vmatpush2.msra.mxu0 0.0
        %638 = vmatprep.subr.mxu0 0.0
        %639 = vmatpush2.msra.mxu0 0.0
        %640 = vmatprep.subr.mxu0 0.0
        %641 = vmatpush2.msra.mxu0 0.0
        %642 = vmatprep.subr.mxu0 0.0
        %643 = vmatpush2.msra.mxu0 0.0
        %644 = vmatprep.subr.mxu0 0.0
        %645 = vmatpush2.msra.mxu0 0.0
        %646 = vmatprep.subr.mxu0 0.0
        %647 = vmatpush2.msra.mxu0 0.0
        %648 = vmatprep.subr.mxu0 0.0
        %649 = vmatpush2.msra.mxu0 0.0
        %650 = vmatprep.subr.mxu0 0.0
        %651 = vmatpush2.msra.mxu0 0.0
        %652 = vmatprep.subr.mxu0 0.0
        %653 = vmatpush2.msra.mxu0 0.0
        %654 = vmatprep.subr.mxu0 0.0
        %655 = vmatpush2.msra.mxu0 0.0
        %656 = vmatprep.subr.mxu0 0.0
        %657 = vmatpush2.msra.mxu0 0.0
        %658 = vmatprep.subr.mxu0 0.0
        %659 = vmatpush2.msra.mxu0 0.0
        %660 = vmatprep.mubr.f32.mxu0 0.0
        %661 = vmatmul.mubr.f32.gmra.mxu0 %v594
        %v662 = vpop.f32.mrf.mxu0
        %v663 = vadd.f32 %v590, %v662
        %v664 = vpop.f32.mrf.mxu0
        %665 = vdwg.mxu0
        %v666 = vxor.u32 %v663, 2147483648
        %v667 = vmul.f32 %v666, 1.442695
        %v668 = vpow.pop %v667
        %v669 = vadd.f32 %v668, 1.0
        %v670 = vrcp.pop %v669
        %v671 = vmul.f32 1.0, %v670
        %v672 = vld [vmem:[%s5] sm:$0xff]
        %v673 = vld [vmem:[%s5 + $0x8] sm:$0xff]
        %v674 = vld [vmem:[%s5 + $0x10] sm:$0xff]
        %v675 = vld [vmem:[%s5 + $0x18] sm:$0xff]
        %v676 = vld [vmem:[%s6] sm:$0x1]
        %v678 = vlaneseq
        %v679 = vshrl.u32 %v678, 7
        %v680 = vsub.s32 0, %v679
        %v681 = vrot.slane %v676, %v680
        %683 = vmatprep.subr.mxu0 0.0
        %684 = vmatpush1.msra.mxu0 0.0
        %685 = vmatprep.subr.mxu0 0.0
        %686 = vmatpush1.msra.mxu0 0.0
        %687 = vmatprep.subr.mxu0 0.0
        %688 = vmatpush1.msra.mxu0 0.0
        %689 = vmatprep.subr.mxu0 0.0
        %690 = vmatpush1.msra.mxu0 0.0
        %691 = vmatprep.subr.mxu0 0.0
        %692 = vmatpush1.msra.mxu0 0.0
        %693 = vmatprep.subr.mxu0 0.0
        %694 = vmatpush1.msra.mxu0 0.0
        %695 = vmatprep.subr.mxu0 0.0
        %696 = vmatpush1.msra.mxu0 0.0
        %697 = vmatprep.subr.mxu0 0.0
        %698 = vmatpush1.msra.mxu0 0.0
        %699 = vmatprep.subr.mxu0 0.0
        %700 = vmatpush1.msra.mxu0 0.0
        %701 = vmatprep.subr.mxu0 0.0
        %702 = vmatpush1.msra.mxu0 0.0
        %703 = vmatprep.subr.mxu0 0.0
        %704 = vmatpush1.msra.mxu0 0.0
        %705 = vmatprep.subr.mxu0 0.0
        %706 = vmatpush1.msra.mxu0 0.0
        %707 = vmatprep.subr.mxu0 0.0
        %708 = vmatpush1.msra.mxu0 %v675
        %709 = vmatprep.subr.mxu0 0.0
        %710 = vmatpush1.msra.mxu0 %v674
        %711 = vmatprep.subr.mxu0 0.0
        %712 = vmatpush1.msra.mxu0 %v673
        %713 = vmatprep.subr.mxu0 0.0
        %714 = vmatpush1.msra.mxu0 %v672
        %715 = vmatprep.subr.mxu0 0.0
        %716 = vmatpush2.msra.mxu0 0.0
        %717 = vmatprep.subr.mxu0 0.0
        %718 = vmatpush2.msra.mxu0 0.0
        %719 = vmatprep.subr.mxu0 0.0
        %720 = vmatpush2.msra.mxu0 0.0
        %721 = vmatprep.subr.mxu0 0.0
        %722 = vmatpush2.msra.mxu0 0.0
        %723 = vmatprep.subr.mxu0 0.0
        %724 = vmatpush2.msra.mxu0 0.0
        %725 = vmatprep.subr.mxu0 0.0
        %726 = vmatpush2.msra.mxu0 0.0
        %727 = vmatprep.subr.mxu0 0.0
        %728 = vmatpush2.msra.mxu0 0.0
        %729 = vmatprep.subr.mxu0 0.0
        %730 = vmatpush2.msra.mxu0 0.0
        %731 = vmatprep.subr.mxu0 0.0
        %732 = vmatpush2.msra.mxu0 0.0
        %733 = vmatprep.subr.mxu0 0.0
        %734 = vmatpush2.msra.mxu0 0.0
        %735 = vmatprep.subr.mxu0 0.0
        %736 = vmatpush2.msra.mxu0 0.0
        %737 = vmatprep.subr.mxu0 0.0
        %738 = vmatpush2.msra.mxu0 0.0
        %739 = vmatprep.subr.mxu0 0.0
        %740 = vmatpush2.msra.mxu0 0.0
        %741 = vmatprep.subr.mxu0 0.0
        %742 = vmatpush2.msra.mxu0 0.0
        %743 = vmatprep.subr.mxu0 0.0
        %744 = vmatpush2.msra.mxu0 0.0
        %745 = vmatprep.subr.mxu0 0.0
        %746 = vmatpush2.msra.mxu0 0.0
        %747 = vmatprep.mubr.f32.mxu0 0.0
        %748 = vmatmul.mubr.f32.gmra.mxu0 %v504
        %v749 = vpop.f32.mrf.mxu0
        %v750 = vadd.f32 %v681, %v749
        %v751 = vpop.f32.mrf.mxu0
        %752 = vdwg.mxu0
        %v753 = vmax.f32 %v750, 0.0
        %v754 = vld [vmem:[%s7] sm:$0xff]
        %v755 = vld [vmem:[%s7 + $0x8] sm:$0xff]
        %v756 = vld [vmem:[%s7 + $0x10] sm:$0xff]
        %v757 = vld [vmem:[%s7 + $0x18] sm:$0xff]
        %v758 = vld [vmem:[%s7 + $0x20] sm:$0xff]
        %v759 = vld [vmem:[%s7 + $0x28] sm:$0xff]
        %v760 = vld [vmem:[%s7 + $0x30] sm:$0xff]
        %v761 = vld [vmem:[%s7 + $0x38] sm:$0xff]
        %v762 = vld [vmem:[%s7 + $0x40] sm:$0xff]
        %v763 = vld [vmem:[%s7 + $0x48] sm:$0xff]
        %v764 = vld [vmem:[%s7 + $0x50] sm:$0xff]
        %v765 = vld [vmem:[%s7 + $0x58] sm:$0xff]
        %v766 = vld [vmem:[%s8] sm:$0x1]
        %v768 = vlaneseq
        %v769 = vshrl.u32 %v768, 7
        %v770 = vsub.s32 0, %v769
        %v771 = vrot.slane %v766, %v770
        %vm773 = vcmask 785408
        %v775 = vsel %vm773, %v753, 0
        %777 = vmatprep.subr.mxu0 0.0
        %778 = vmatpush1.msra.mxu0 0.0
        %779 = vmatprep.subr.mxu0 0.0
        %780 = vmatpush1.msra.mxu0 0.0
        %781 = vmatprep.subr.mxu0 0.0
        %782 = vmatpush1.msra.mxu0 0.0
        %783 = vmatprep.subr.mxu0 0.0
        %784 = vmatpush1.msra.mxu0 0.0
        %785 = vmatprep.subr.mxu0 0.0
        %786 = vmatpush1.msra.mxu0 %v765
        %787 = vmatprep.subr.mxu0 0.0
        %788 = vmatpush1.msra.mxu0 %v764
        %789 = vmatprep.subr.mxu0 0.0
        %790 = vmatpush1.msra.mxu0 %v763
        %791 = vmatprep.subr.mxu0 0.0
        %792 = vmatpush1.msra.mxu0 %v762
        %793 = vmatprep.subr.mxu0 0.0
        %794 = vmatpush1.msra.mxu0 %v761
        %795 = vmatprep.subr.mxu0 0.0
        %796 = vmatpush1.msra.mxu0 %v760
        %797 = vmatprep.subr.mxu0 0.0
        %798 = vmatpush1.msra.mxu0 %v759
        %799 = vmatprep.subr.mxu0 0.0
        %800 = vmatpush1.msra.mxu0 %v758
        %801 = vmatprep.subr.mxu0 0.0
        %802 = vmatpush1.msra.mxu0 %v757
        %803 = vmatprep.subr.mxu0 0.0
        %804 = vmatpush1.msra.mxu0 %v756
        %805 = vmatprep.subr.mxu0 0.0
        %806 = vmatpush1.msra.mxu0 %v755
        %807 = vmatprep.subr.mxu0 0.0
        %808 = vmatpush1.msra.mxu0 %v754
        %809 = vmatprep.subr.mxu0 0.0
        %810 = vmatpush2.msra.mxu0 0.0
        %811 = vmatprep.subr.mxu0 0.0
        %812 = vmatpush2.msra.mxu0 0.0
        %813 = vmatprep.subr.mxu0 0.0
        %814 = vmatpush2.msra.mxu0 0.0
        %815 = vmatprep.subr.mxu0 0.0
        %816 = vmatpush2.msra.mxu0 0.0
        %817 = vmatprep.subr.mxu0 0.0
        %818 = vmatpush2.msra.mxu0 0.0
        %819 = vmatprep.subr.mxu0 0.0
        %820 = vmatpush2.msra.mxu0 0.0
        %821 = vmatprep.subr.mxu0 0.0
        %822 = vmatpush2.msra.mxu0 0.0
        %823 = vmatprep.subr.mxu0 0.0
        %824 = vmatpush2.msra.mxu0 0.0
        %825 = vmatprep.subr.mxu0 0.0
        %826 = vmatpush2.msra.mxu0 0.0
        %827 = vmatprep.subr.mxu0 0.0
        %828 = vmatpush2.msra.mxu0 0.0
        %829 = vmatprep.subr.mxu0 0.0
        %830 = vmatpush2.msra.mxu0 0.0
        %831 = vmatprep.subr.mxu0 0.0
        %832 = vmatpush2.msra.mxu0 0.0
        %833 = vmatprep.subr.mxu0 0.0
        %834 = vmatpush2.msra.mxu0 0.0
        %835 = vmatprep.subr.mxu0 0.0
        %836 = vmatpush2.msra.mxu0 0.0
        %837 = vmatprep.subr.mxu0 0.0
        %838 = vmatpush2.msra.mxu0 0.0
        %839 = vmatprep.subr.mxu0 0.0
        %840 = vmatpush2.msra.mxu0 0.0
        %841 = vmatprep.mubr.f32.mxu0 0.0
        %842 = vmatmul.mubr.f32.gmra.mxu0 %v775
        %v843 = vpop.f32.mrf.mxu0
        %v844 = vadd.f32 %v771, %v843
        %v845 = vpop.f32.mrf.mxu0
        %846 = vdwg.mxu0
        %v847 = vxor.u32 %v844, 2147483648
        %v848 = vmul.f32 %v847, 1.442695
        %v849 = vpow.pop %v848
        %v850 = vadd.f32 %v849, 1.0
        %v851 = vrcp.pop %v850
        %v852 = vmul.f32 1.0, %v851
        %v853 = vld [vmem:[%s9] sm:$0xff]
        %v854 = vld [vmem:[%s9 + $0x8] sm:$0xff]
        %v855 = vld [vmem:[%s9 + $0x10] sm:$0xff]
        %v856 = vld [vmem:[%s9 + $0x18] sm:$0xff]
        %v857 = vld [vmem:[%s10] sm:$0x1]
        %v859 = vlaneseq
        %v860 = vshrl.u32 %v859, 7
        %v861 = vsub.s32 0, %v860
        %v862 = vrot.slane %v857, %v861
        %v865 = vsel %vm502, %v671, 0
        %867 = vmatprep.subr.mxu0 0.0
        %868 = vmatpush1.msra.mxu0 0.0
        %869 = vmatprep.subr.mxu0 0.0
        %870 = vmatpush1.msra.mxu0 0.0
        %871 = vmatprep.subr.mxu0 0.0
        %872 = vmatpush1.msra.mxu0 0.0
        %873 = vmatprep.subr.mxu0 0.0
        %874 = vmatpush1.msra.mxu0 0.0
        %875 = vmatprep.subr.mxu0 0.0
        %876 = vmatpush1.msra.mxu0 0.0
        %877 = vmatprep.subr.mxu0 0.0
        %878 = vmatpush1.msra.mxu0 0.0
        %879 = vmatprep.subr.mxu0 0.0
        %880 = vmatpush1.msra.mxu0 0.0
        %881 = vmatprep.subr.mxu0 0.0
        %882 = vmatpush1.msra.mxu0 0.0
        %883 = vmatprep.subr.mxu0 0.0
        %884 = vmatpush1.msra.mxu0 0.0
        %885 = vmatprep.subr.mxu0 0.0
        %886 = vmatpush1.msra.mxu0 0.0
        %887 = vmatprep.subr.mxu0 0.0
        %888 = vmatpush1.msra.mxu0 0.0
        %889 = vmatprep.subr.mxu0 0.0
        %890 = vmatpush1.msra.mxu0 0.0
        %891 = vmatprep.subr.mxu0 0.0
        %892 = vmatpush1.msra.mxu0 %v856
        %893 = vmatprep.subr.mxu0 0.0
        %894 = vmatpush1.msra.mxu0 %v855
        %895 = vmatprep.subr.mxu0 0.0
        %896 = vmatpush1.msra.mxu0 %v854
        %897 = vmatprep.subr.mxu0 0.0
        %898 = vmatpush1.msra.mxu0 %v853
        %899 = vmatprep.subr.mxu0 0.0
        %900 = vmatpush2.msra.mxu0 0.0
        %901 = vmatprep.subr.mxu0 0.0
        %902 = vmatpush2.msra.mxu0 0.0
        %903 = vmatprep.subr.mxu0 0.0
        %904 = vmatpush2.msra.mxu0 0.0
        %905 = vmatprep.subr.mxu0 0.0
        %906 = vmatpush2.msra.mxu0 0.0
        %907 = vmatprep.subr.mxu0 0.0
        %908 = vmatpush2.msra.mxu0 0.0
        %909 = vmatprep.subr.mxu0 0.0
        %910 = vmatpush2.msra.mxu0 0.0
        %911 = vmatprep.subr.mxu0 0.0
        %912 = vmatpush2.msra.mxu0 0.0
        %913 = vmatprep.subr.mxu0 0.0
        %914 = vmatpush2.msra.mxu0 0.0
        %915 = vmatprep.subr.mxu0 0.0
        %916 = vmatpush2.msra.mxu0 0.0
        %917 = vmatprep.subr.mxu0 0.0
        %918 = vmatpush2.msra.mxu0 0.0
        %919 = vmatprep.subr.mxu0 0.0
        %920 = vmatpush2.msra.mxu0 0.0
        %921 = vmatprep.subr.mxu0 0.0
        %922 = vmatpush2.msra.mxu0 0.0
        %923 = vmatprep.subr.mxu0 0.0
        %924 = vmatpush2.msra.mxu0 0.0
        %925 = vmatprep.subr.mxu0 0.0
        %926 = vmatpush2.msra.mxu0 0.0
        %927 = vmatprep.subr.mxu0 0.0
        %928 = vmatpush2.msra.mxu0 0.0
        %929 = vmatprep.subr.mxu0 0.0
        %930 = vmatpush2.msra.mxu0 0.0
        %931 = vmatprep.mubr.f32.mxu0 0.0
        %932 = vmatmul.mubr.f32.gmra.mxu0 %v865
        %v933 = vpop.f32.mrf.mxu0
        %v934 = vadd.f32 %v862, %v933
        %v935 = vpop.f32.mrf.mxu0
        %936 = vdwg.mxu0
        %v937 = vld [vmem:[%s11] sm:$0xff]
        %v938 = vld [vmem:[%s11 + $0x8] sm:$0xff]
        %v939 = vld [vmem:[%s11 + $0x10] sm:$0xff]
        %v940 = vld [vmem:[%s11 + $0x18] sm:$0xff]
        %v941 = vld [vmem:[%s12] sm:$0x1]
        %v943 = vlaneseq
        %v944 = vshrl.u32 %v943, 7
        %v945 = vsub.s32 0, %v944
        %v946 = vrot.slane %v941, %v945
        %948 = vmatprep.subr.mxu0 0.0
        %949 = vmatpush1.msra.mxu0 0.0
        %950 = vmatprep.subr.mxu0 0.0
        %951 = vmatpush1.msra.mxu0 0.0
        %952 = vmatprep.subr.mxu0 0.0
        %953 = vmatpush1.msra.mxu0 0.0
        %954 = vmatprep.subr.mxu0 0.0
        %955 = vmatpush1.msra.mxu0 0.0
        %956 = vmatprep.subr.mxu0 0.0
        %957 = vmatpush1.msra.mxu0 0.0
        %958 = vmatprep.subr.mxu0 0.0
        %959 = vmatpush1.msra.mxu0 0.0
        %960 = vmatprep.subr.mxu0 0.0
        %961 = vmatpush1.msra.mxu0 0.0
        %962 = vmatprep.subr.mxu0 0.0
        %963 = vmatpush1.msra.mxu0 0.0
        %964 = vmatprep.subr.mxu0 0.0
        %965 = vmatpush1.msra.mxu0 0.0
        %966 = vmatprep.subr.mxu0 0.0
        %967 = vmatpush1.msra.mxu0 0.0
        %968 = vmatprep.subr.mxu0 0.0
        %969 = vmatpush1.msra.mxu0 0.0
        %970 = vmatprep.subr.mxu0 0.0
        %971 = vmatpush1.msra.mxu0 0.0
        %972 = vmatprep.subr.mxu0 0.0
        %973 = vmatpush1.msra.mxu0 %v940
        %974 = vmatprep.subr.mxu0 0.0
        %975 = vmatpush1.msra.mxu0 %v939
        %976 = vmatprep.subr.mxu0 0.0
        %977 = vmatpush1.msra.mxu0 %v938
        %978 = vmatprep.subr.mxu0 0.0
        %979 = vmatpush1.msra.mxu0 %v937
        %980 = vmatprep.subr.mxu0 0.0
        %981 = vmatpush2.msra.mxu0 0.0
        %982 = vmatprep.subr.mxu0 0.0
        %983 = vmatpush2.msra.mxu0 0.0
        %984 = vmatprep.subr.mxu0 0.0
        %985 = vmatpush2.msra.mxu0 0.0
        %986 = vmatprep.subr.mxu0 0.0
        %987 = vmatpush2.msra.mxu0 0.0
        %988 = vmatprep.subr.mxu0 0.0
        %989 = vmatpush2.msra.mxu0 0.0
        %990 = vmatprep.subr.mxu0 0.0
        %991 = vmatpush2.msra.mxu0 0.0
        %992 = vmatprep.subr.mxu0 0.0
        %993 = vmatpush2.msra.mxu0 0.0
        %994 = vmatprep.subr.mxu0 0.0
        %995 = vmatpush2.msra.mxu0 0.0
        %996 = vmatprep.subr.mxu0 0.0
        %997 = vmatpush2.msra.mxu0 0.0
        %998 = vmatprep.subr.mxu0 0.0
        %999 = vmatpush2.msra.mxu0 0.0
        %1000 = vmatprep.subr.mxu0 0.0
        %1001 = vmatpush2.msra.mxu0 0.0
        %1002 = vmatprep.subr.mxu0 0.0
        %1003 = vmatpush2.msra.mxu0 0.0
        %1004 = vmatprep.subr.mxu0 0.0
        %1005 = vmatpush2.msra.mxu0 0.0
        %1006 = vmatprep.subr.mxu0 0.0
        %1007 = vmatpush2.msra.mxu0 0.0
        %1008 = vmatprep.subr.mxu0 0.0
        %1009 = vmatpush2.msra.mxu0 0.0
        %1010 = vmatprep.subr.mxu0 0.0
        %1011 = vmatpush2.msra.mxu0 0.0
        %1012 = vmatprep.mubr.f32.mxu0 0.0
        %1013 = vmatmul.mubr.f32.gmra.mxu0 %v865
        %v1014 = vpop.f32.mrf.mxu0
        %v1015 = vadd.f32 %v946, %v1014
        %v1016 = vpop.f32.mrf.mxu0
        %1017 = vdwg.mxu0
        %v1018 = vld [vmem:[%s13] sm:$0xff]
        %v1019 = vld [vmem:[%s13 + $0x8] sm:$0xff]
        %v1020 = vld [vmem:[%s13 + $0x10] sm:$0xff]
        %v1021 = vld [vmem:[%s13 + $0x18] sm:$0xff]
        %v1022 = vld [vmem:[%s14] sm:$0x1]
        %v1024 = vlaneseq
        %v1025 = vshrl.u32 %v1024, 7
        %v1026 = vsub.s32 0, %v1025
        %v1027 = vrot.slane %v1022, %v1026
        %1029 = vmatprep.subr.mxu0 0.0
        %1030 = vmatpush1.msra.mxu0 0.0
        %1031 = vmatprep.subr.mxu0 0.0
        %1032 = vmatpush1.msra.mxu0 0.0
        %1033 = vmatprep.subr.mxu0 0.0
        %1034 = vmatpush1.msra.mxu0 0.0
        %1035 = vmatprep.subr.mxu0 0.0
        %1036 = vmatpush1.msra.mxu0 0.0
        %1037 = vmatprep.subr.mxu0 0.0
        %1038 = vmatpush1.msra.mxu0 0.0
        %1039 = vmatprep.subr.mxu0 0.0
        %1040 = vmatpush1.msra.mxu0 0.0
        %1041 = vmatprep.subr.mxu0 0.0
        %1042 = vmatpush1.msra.mxu0 0.0
        %1043 = vmatprep.subr.mxu0 0.0
        %1044 = vmatpush1.msra.mxu0 0.0
        %1045 = vmatprep.subr.mxu0 0.0
        %1046 = vmatpush1.msra.mxu0 0.0
        %1047 = vmatprep.subr.mxu0 0.0
        %1048 = vmatpush1.msra.mxu0 0.0
        %1049 = vmatprep.subr.mxu0 0.0
        %1050 = vmatpush1.msra.mxu0 0.0
        %1051 = vmatprep.subr.mxu0 0.0
        %1052 = vmatpush1.msra.mxu0 0.0
        %1053 = vmatprep.subr.mxu0 0.0
        %1054 = vmatpush1.msra.mxu0 %v1021
        %1055 = vmatprep.subr.mxu0 0.0
        %1056 = vmatpush1.msra.mxu0 %v1020
        %1057 = vmatprep.subr.mxu0 0.0
        %1058 = vmatpush1.msra.mxu0 %v1019
        %1059 = vmatprep.subr.mxu0 0.0
        %1060 = vmatpush1.msra.mxu0 %v1018
        %1061 = vmatprep.subr.mxu0 0.0
        %1062 = vmatpush2.msra.mxu0 0.0
        %1063 = vmatprep.subr.mxu0 0.0
        %1064 = vmatpush2.msra.mxu0 0.0
        %1065 = vmatprep.subr.mxu0 0.0
        %1066 = vmatpush2.msra.mxu0 0.0
        %1067 = vmatprep.subr.mxu0 0.0
        %1068 = vmatpush2.msra.mxu0 0.0
        %1069 = vmatprep.subr.mxu0 0.0
        %1070 = vmatpush2.msra.mxu0 0.0
        %1071 = vmatprep.subr.mxu0 0.0
        %1072 = vmatpush2.msra.mxu0 0.0
        %1073 = vmatprep.subr.mxu0 0.0
        %1074 = vmatpush2.msra.mxu0 0.0
        %1075 = vmatprep.subr.mxu0 0.0
        %1076 = vmatpush2.msra.mxu0 0.0
        %1077 = vmatprep.subr.mxu0 0.0
        %1078 = vmatpush2.msra.mxu0 0.0
        %1079 = vmatprep.subr.mxu0 0.0
        %1080 = vmatpush2.msra.mxu0 0.0
        %1081 = vmatprep.subr.mxu0 0.0
        %1082 = vmatpush2.msra.mxu0 0.0
        %1083 = vmatprep.subr.mxu0 0.0
        %1084 = vmatpush2.msra.mxu0 0.0
        %1085 = vmatprep.subr.mxu0 0.0
        %1086 = vmatpush2.msra.mxu0 0.0
        %1087 = vmatprep.subr.mxu0 0.0
        %1088 = vmatpush2.msra.mxu0 0.0
        %1089 = vmatprep.subr.mxu0 0.0
        %1090 = vmatpush2.msra.mxu0 0.0
        %1091 = vmatprep.subr.mxu0 0.0
        %1092 = vmatpush2.msra.mxu0 0.0
        %1093 = vmatprep.mubr.f32.mxu0 0.0
        %1094 = vmatmul.mubr.f32.gmra.mxu0 %v865
        %v1095 = vpop.f32.mrf.mxu0
        %v1096 = vadd.f32 %v1027, %v1095
        %v1097 = vpop.f32.mrf.mxu0
        %1098 = vdwg.mxu0
        %v1100 = vsel %vm502, %v852, 0
        %1102 = vmatprep.subr.mxu0 0.0
        %1103 = vmatpush1.msra.mxu0 0.0
        %1104 = vmatprep.subr.mxu0 0.0
        %1105 = vmatpush1.msra.mxu0 0.0
        %1106 = vmatprep.subr.mxu0 0.0
        %1107 = vmatpush1.msra.mxu0 0.0
        %1108 = vmatprep.subr.mxu0 0.0
        %1109 = vmatpush1.msra.mxu0 0.0
        %1110 = vmatprep.subr.mxu0 0.0
        %1111 = vmatpush1.msra.mxu0 0.0
        %1112 = vmatprep.subr.mxu0 0.0
        %1113 = vmatpush1.msra.mxu0 0.0
        %1114 = vmatprep.subr.mxu0 0.0
        %1115 = vmatpush1.msra.mxu0 0.0
        %1116 = vmatprep.subr.mxu0 0.0
        %1117 = vmatpush1.msra.mxu0 0.0
        %1118 = vmatprep.subr.mxu0 0.0
        %1119 = vmatpush1.msra.mxu0 0.0
        %1120 = vmatprep.subr.mxu0 0.0
        %1121 = vmatpush1.msra.mxu0 0.0
        %1122 = vmatprep.subr.mxu0 0.0
        %1123 = vmatpush1.msra.mxu0 0.0
        %1124 = vmatprep.subr.mxu0 0.0
        %1125 = vmatpush1.msra.mxu0 0.0
        %1126 = vmatprep.subr.mxu0 0.0
        %1127 = vmatpush1.msra.mxu0 %v856
        %1128 = vmatprep.subr.mxu0 0.0
        %1129 = vmatpush1.msra.mxu0 %v855
        %1130 = vmatprep.subr.mxu0 0.0
        %1131 = vmatpush1.msra.mxu0 %v854
        %1132 = vmatprep.subr.mxu0 0.0
        %1133 = vmatpush1.msra.mxu0 %v853
        %1134 = vmatprep.subr.mxu0 0.0
        %1135 = vmatpush2.msra.mxu0 0.0
        %1136 = vmatprep.subr.mxu0 0.0
        %1137 = vmatpush2.msra.mxu0 0.0
        %1138 = vmatprep.subr.mxu0 0.0
        %1139 = vmatpush2.msra.mxu0 0.0
        %1140 = vmatprep.subr.mxu0 0.0
        %1141 = vmatpush2.msra.mxu0 0.0
        %1142 = vmatprep.subr.mxu0 0.0
        %1143 = vmatpush2.msra.mxu0 0.0
        %1144 = vmatprep.subr.mxu0 0.0
        %1145 = vmatpush2.msra.mxu0 0.0
        %1146 = vmatprep.subr.mxu0 0.0
        %1147 = vmatpush2.msra.mxu0 0.0
        %1148 = vmatprep.subr.mxu0 0.0
        %1149 = vmatpush2.msra.mxu0 0.0
        %1150 = vmatprep.subr.mxu0 0.0
        %1151 = vmatpush2.msra.mxu0 0.0
        %1152 = vmatprep.subr.mxu0 0.0
        %1153 = vmatpush2.msra.mxu0 0.0
        %1154 = vmatprep.subr.mxu0 0.0
        %1155 = vmatpush2.msra.mxu0 0.0
        %1156 = vmatprep.subr.mxu0 0.0
        %1157 = vmatpush2.msra.mxu0 0.0
        %1158 = vmatprep.subr.mxu0 0.0
        %1159 = vmatpush2.msra.mxu0 0.0
        %1160 = vmatprep.subr.mxu0 0.0
        %1161 = vmatpush2.msra.mxu0 0.0
        %1162 = vmatprep.subr.mxu0 0.0
        %1163 = vmatpush2.msra.mxu0 0.0
        %1164 = vmatprep.subr.mxu0 0.0
        %1165 = vmatpush2.msra.mxu0 0.0
        %1166 = vmatprep.mubr.f32.mxu0 0.0
        %1167 = vmatmul.mubr.f32.gmra.mxu0 %v1100
        %v1168 = vpop.f32.mrf.mxu0
        %v1169 = vadd.f32 %v862, %v1168
        %v1170 = vpop.f32.mrf.mxu0
        %1171 = vdwg.mxu0
        %1172 = vmatprep.subr.mxu0 0.0
        %1173 = vmatpush1.msra.mxu0 0.0
        %1174 = vmatprep.subr.mxu0 0.0
        %1175 = vmatpush1.msra.mxu0 0.0
        %1176 = vmatprep.subr.mxu0 0.0
        %1177 = vmatpush1.msra.mxu0 0.0
        %1178 = vmatprep.subr.mxu0 0.0
        %1179 = vmatpush1.msra.mxu0 0.0
        %1180 = vmatprep.subr.mxu0 0.0
        %1181 = vmatpush1.msra.mxu0 0.0
        %1182 = vmatprep.subr.mxu0 0.0
        %1183 = vmatpush1.msra.mxu0 0.0
        %1184 = vmatprep.subr.mxu0 0.0
        %1185 = vmatpush1.msra.mxu0 0.0
        %1186 = vmatprep.subr.mxu0 0.0
        %1187 = vmatpush1.msra.mxu0 0.0
        %1188 = vmatprep.subr.mxu0 0.0
        %1189 = vmatpush1.msra.mxu0 0.0
        %1190 = vmatprep.subr.mxu0 0.0
        %1191 = vmatpush1.msra.mxu0 0.0
        %1192 = vmatprep.subr.mxu0 0.0
        %1193 = vmatpush1.msra.mxu0 0.0
        %1194 = vmatprep.subr.mxu0 0.0
        %1195 = vmatpush1.msra.mxu0 0.0
        %1196 = vmatprep.subr.mxu0 0.0
        %1197 = vmatpush1.msra.mxu0 %v940
        %1198 = vmatprep.subr.mxu0 0.0
        %1199 = vmatpush1.msra.mxu0 %v939
        %1200 = vmatprep.subr.mxu0 0.0
        %1201 = vmatpush1.msra.mxu0 %v938
        %1202 = vmatprep.subr.mxu0 0.0
        %1203 = vmatpush1.msra.mxu0 %v937
        %1204 = vmatprep.subr.mxu0 0.0
        %1205 = vmatpush2.msra.mxu0 0.0
        %1206 = vmatprep.subr.mxu0 0.0
        %1207 = vmatpush2.msra.mxu0 0.0
        %1208 = vmatprep.subr.mxu0 0.0
        %1209 = vmatpush2.msra.mxu0 0.0
        %1210 = vmatprep.subr.mxu0 0.0
        %1211 = vmatpush2.msra.mxu0 0.0
        %1212 = vmatprep.subr.mxu0 0.0
        %1213 = vmatpush2.msra.mxu0 0.0
        %1214 = vmatprep.subr.mxu0 0.0
        %1215 = vmatpush2.msra.mxu0 0.0
        %1216 = vmatprep.subr.mxu0 0.0
        %1217 = vmatpush2.msra.mxu0 0.0
        %1218 = vmatprep.subr.mxu0 0.0
        %1219 = vmatpush2.msra.mxu0 0.0
        %1220 = vmatprep.subr.mxu0 0.0
        %1221 = vmatpush2.msra.mxu0 0.0
        %1222 = vmatprep.subr.mxu0 0.0
        %1223 = vmatpush2.msra.mxu0 0.0
        %1224 = vmatprep.subr.mxu0 0.0
        %1225 = vmatpush2.msra.mxu0 0.0
        %1226 = vmatprep.subr.mxu0 0.0
        %1227 = vmatpush2.msra.mxu0 0.0
        %1228 = vmatprep.subr.mxu0 0.0
        %1229 = vmatpush2.msra.mxu0 0.0
        %1230 = vmatprep.subr.mxu0 0.0
        %1231 = vmatpush2.msra.mxu0 0.0
        %1232 = vmatprep.subr.mxu0 0.0
        %1233 = vmatpush2.msra.mxu0 0.0
        %1234 = vmatprep.subr.mxu0 0.0
        %1235 = vmatpush2.msra.mxu0 0.0
        %1236 = vmatprep.mubr.f32.mxu0 0.0
        %1237 = vmatmul.mubr.f32.gmra.mxu0 %v1100
        %v1238 = vpop.f32.mrf.mxu0
        %v1239 = vadd.f32 %v946, %v1238
        %v1240 = vpop.f32.mrf.mxu0
        %1241 = vdwg.mxu0
        %1242 = vmatprep.subr.mxu0 0.0
        %1243 = vmatpush1.msra.mxu0 0.0
        %1244 = vmatprep.subr.mxu0 0.0
        %1245 = vmatpush1.msra.mxu0 0.0
        %1246 = vmatprep.subr.mxu0 0.0
        %1247 = vmatpush1.msra.mxu0 0.0
        %1248 = vmatprep.subr.mxu0 0.0
        %1249 = vmatpush1.msra.mxu0 0.0
        %1250 = vmatprep.subr.mxu0 0.0
        %1251 = vmatpush1.msra.mxu0 0.0
        %1252 = vmatprep.subr.mxu0 0.0
        %1253 = vmatpush1.msra.mxu0 0.0
        %1254 = vmatprep.subr.mxu0 0.0
        %1255 = vmatpush1.msra.mxu0 0.0
        %1256 = vmatprep.subr.mxu0 0.0
        %1257 = vmatpush1.msra.mxu0 0.0
        %1258 = vmatprep.subr.mxu0 0.0
        %1259 = vmatpush1.msra.mxu0 0.0
        %1260 = vmatprep.subr.mxu0 0.0
        %1261 = vmatpush1.msra.mxu0 0.0
        %1262 = vmatprep.subr.mxu0 0.0
        %1263 = vmatpush1.msra.mxu0 0.0
        %1264 = vmatprep.subr.mxu0 0.0
        %1265 = vmatpush1.msra.mxu0 0.0
        %1266 = vmatprep.subr.mxu0 0.0
        %1267 = vmatpush1.msra.mxu0 %v1021
        %1268 = vmatprep.subr.mxu0 0.0
        %1269 = vmatpush1.msra.mxu0 %v1020
        %1270 = vmatprep.subr.mxu0 0.0
        %1271 = vmatpush1.msra.mxu0 %v1019
        %1272 = vmatprep.subr.mxu0 0.0
        %1273 = vmatpush1.msra.mxu0 %v1018
        %1274 = vmatprep.subr.mxu0 0.0
        %1275 = vmatpush2.msra.mxu0 0.0
        %1276 = vmatprep.subr.mxu0 0.0
        %1277 = vmatpush2.msra.mxu0 0.0
        %1278 = vmatprep.subr.mxu0 0.0
        %1279 = vmatpush2.msra.mxu0 0.0
        %1280 = vmatprep.subr.mxu0 0.0
        %1281 = vmatpush2.msra.mxu0 0.0
        %1282 = vmatprep.subr.mxu0 0.0
        %1283 = vmatpush2.msra.mxu0 0.0
        %1284 = vmatprep.subr.mxu0 0.0
        %1285 = vmatpush2.msra.mxu0 0.0
        %1286 = vmatprep.subr.mxu0 0.0
        %1287 = vmatpush2.msra.mxu0 0.0
        %1288 = vmatprep.subr.mxu0 0.0
        %1289 = vmatpush2.msra.mxu0 0.0
        %1290 = vmatprep.subr.mxu0 0.0
        %1291 = vmatpush2.msra.mxu0 0.0
        %1292 = vmatprep.subr.mxu0 0.0
        %1293 = vmatpush2.msra.mxu0 0.0
        %1294 = vmatprep.subr.mxu0 0.0
        %1295 = vmatpush2.msra.mxu0 0.0
        %1296 = vmatprep.subr.mxu0 0.0
        %1297 = vmatpush2.msra.mxu0 0.0
        %1298 = vmatprep.subr.mxu0 0.0
        %1299 = vmatpush2.msra.mxu0 0.0
        %1300 = vmatprep.subr.mxu0 0.0
        %1301 = vmatpush2.msra.mxu0 0.0
        %1302 = vmatprep.subr.mxu0 0.0
        %1303 = vmatpush2.msra.mxu0 0.0
        %1304 = vmatprep.subr.mxu0 0.0
        %1305 = vmatpush2.msra.mxu0 0.0
        %1306 = vmatprep.mubr.f32.mxu0 0.0
        %1307 = vmatmul.mubr.f32.gmra.mxu0 %v1100
        %v1308 = vpop.f32.mrf.mxu0
        %v1309 = vadd.f32 %v1027, %v1308
        %v1310 = vpop.f32.mrf.mxu0
        %1311 = vdwg.mxu0
        %v1313 = vsel %vm502, %v934, 0
        %v1316 = vsel %vm502, %v1239, 0
        %1318 = vmatprep.subr.mxu0 0.0
        %1319 = vmatpush1.xpose.msra.mxu0 0.0
        %1320 = vmatprep.subr.mxu0 0.0
        %1321 = vmatpush1.xpose.msra.mxu0 0.0
        %1322 = vmatprep.subr.mxu0 0.0
        %1323 = vmatpush1.xpose.msra.mxu0 0.0
        %1324 = vmatprep.subr.mxu0 0.0
        %1325 = vmatpush1.xpose.msra.mxu0 0.0
        %1326 = vmatprep.subr.mxu0 0.0
        %1327 = vmatpush1.xpose.msra.mxu0 0.0
        %1328 = vmatprep.subr.mxu0 0.0
        %1329 = vmatpush1.xpose.msra.mxu0 0.0
        %1330 = vmatprep.subr.mxu0 0.0
        %1331 = vmatpush1.xpose.msra.mxu0 0.0
        %1332 = vmatprep.subr.mxu0 0.0
        %1333 = vmatpush1.xpose.msra.mxu0 0.0
        %1334 = vmatprep.subr.mxu0 0.0
        %1335 = vmatpush1.xpose.msra.mxu0 0.0
        %1336 = vmatprep.subr.mxu0 0.0
        %1337 = vmatpush1.xpose.msra.mxu0 0.0
        %1338 = vmatprep.subr.mxu0 0.0
        %1339 = vmatpush1.xpose.msra.mxu0 0.0
        %1340 = vmatprep.subr.mxu0 0.0
        %1341 = vmatpush1.xpose.msra.mxu0 0.0
        %1342 = vmatprep.subr.mxu0 0.0
        %1343 = vmatpush1.xpose.msra.mxu0 0.0
        %1344 = vmatprep.subr.mxu0 0.0
        %1345 = vmatpush1.xpose.msra.mxu0 0.0
        %1346 = vmatprep.subr.mxu0 0.0
        %1347 = vmatpush1.xpose.msra.mxu0 0.0
        %1348 = vmatprep.subr.mxu0 0.0
        %1349 = vmatpush1.xpose.msra.mxu0 %v1316
        %1350 = vmatprep.subr.mxu0 0.0
        %1351 = vmatpush2.xpose.msra.mxu0 0.0
        %1352 = vmatprep.subr.mxu0 0.0
        %1353 = vmatpush2.xpose.msra.mxu0 0.0
        %1354 = vmatprep.subr.mxu0 0.0
        %1355 = vmatpush2.xpose.msra.mxu0 0.0
        %1356 = vmatprep.subr.mxu0 0.0
        %1357 = vmatpush2.xpose.msra.mxu0 0.0
        %1358 = vmatprep.subr.mxu0 0.0
        %1359 = vmatpush2.xpose.msra.mxu0 0.0
        %1360 = vmatprep.subr.mxu0 0.0
        %1361 = vmatpush2.xpose.msra.mxu0 0.0
        %1362 = vmatprep.subr.mxu0 0.0
        %1363 = vmatpush2.xpose.msra.mxu0 0.0
        %1364 = vmatprep.subr.mxu0 0.0
        %1365 = vmatpush2.xpose.msra.mxu0 0.0
        %1366 = vmatprep.subr.mxu0 0.0
        %1367 = vmatpush2.xpose.msra.mxu0 0.0
        %1368 = vmatprep.subr.mxu0 0.0
        %1369 = vmatpush2.xpose.msra.mxu0 0.0
        %1370 = vmatprep.subr.mxu0 0.0
        %1371 = vmatpush2.xpose.msra.mxu0 0.0
        %1372 = vmatprep.subr.mxu0 0.0
        %1373 = vmatpush2.xpose.msra.mxu0 0.0
        %1374 = vmatprep.subr.mxu0 0.0
        %1375 = vmatpush2.xpose.msra.mxu0 0.0
        %1376 = vmatprep.subr.mxu0 0.0
        %1377 = vmatpush2.xpose.msra.mxu0 0.0
        %1378 = vmatprep.subr.mxu0 0.0
        %1379 = vmatpush2.xpose.msra.mxu0 0.0
        %1380 = vmatprep.subr.mxu0 0.0
        %1381 = vmatpush2.xpose.msra.mxu0 0.0
        %1382 = vmatprep.mubr.f32.mxu0 0.0
        %1383 = vmatmul.mubr.f32.gmra.mxu0 %v1313
        %v1384 = vpop.f32.mrf.mxu0
        %v1385 = vadd.f32 0.0, %v1384
        %v1386 = vpop.f32.mrf.mxu0
        %1387 = vdwg.mxu0
        %vm1388 = vcmask 64512
        %v1389 = vsel %vm1388, %v1385, -inf
        %1390 = vmax.xlane.f32.xlu0 %v1389
        %v1391 = vpop.xlane.xlu0 %1390
        %v1392 = vsub.f32 %v1385, %v1391
        %v1393 = vmul.f32 %v1392, 1.442695
        %v1394 = vpow.pop %v1393
        %v1395 = vsel %vm1388, %v1394, 0.0
        %1396 = vadd.xlane.f32.xlu0 %v1395
        %v1397 = vpop.xlane.xlu0 %1396
        %v1398 = vrcp.pop %v1397
        %v1399 = vmul.f32 %v1394, %v1398
        %v1401 = vsel %vm502, %v1169, 0
        %v1404 = vsel %vm502, %v1015, 0
        %1406 = vmatprep.subr.mxu0 0.0
        %1407 = vmatpush1.xpose.msra.mxu0 0.0
        %1408 = vmatprep.subr.mxu0 0.0
        %1409 = vmatpush1.xpose.msra.mxu0 0.0
        %1410 = vmatprep.subr.mxu0 0.0
        %1411 = vmatpush1.xpose.msra.mxu0 0.0
        %1412 = vmatprep.subr.mxu0 0.0
        %1413 = vmatpush1.xpose.msra.mxu0 0.0
        %1414 = vmatprep.subr.mxu0 0.0
        %1415 = vmatpush1.xpose.msra.mxu0 0.0
        %1416 = vmatprep.subr.mxu0 0.0
        %1417 = vmatpush1.xpose.msra.mxu0 0.0
        %1418 = vmatprep.subr.mxu0 0.0
        %1419 = vmatpush1.xpose.msra.mxu0 0.0
        %1420 = vmatprep.subr.mxu0 0.0
        %1421 = vmatpush1.xpose.msra.mxu0 0.0
        %1422 = vmatprep.subr.mxu0 0.0
        %1423 = vmatpush1.xpose.msra.mxu0 0.0
        %1424 = vmatprep.subr.mxu0 0.0
        %1425 = vmatpush1.xpose.msra.mxu0 0.0
        %1426 = vmatprep.subr.mxu0 0.0
        %1427 = vmatpush1.xpose.msra.mxu0 0.0
        %1428 = vmatprep.subr.mxu0 0.0
        %1429 = vmatpush1.xpose.msra.mxu0 0.0
        %1430 = vmatprep.subr.mxu0 0.0
        %1431 = vmatpush1.xpose.msra.mxu0 0.0
        %1432 = vmatprep.subr.mxu0 0.0
        %1433 = vmatpush1.xpose.msra.mxu0 0.0
        %1434 = vmatprep.subr.mxu0 0.0
        %1435 = vmatpush1.xpose.msra.mxu0 0.0
        %1436 = vmatprep.subr.mxu0 0.0
        %1437 = vmatpush1.xpose.msra.mxu0 %v1404
        %1438 = vmatprep.subr.mxu0 0.0
        %1439 = vmatpush2.xpose.msra.mxu0 0.0
        %1440 = vmatprep.subr.mxu0 0.0
        %1441 = vmatpush2.xpose.msra.mxu0 0.0
        %1442 = vmatprep.subr.mxu0 0.0
        %1443 = vmatpush2.xpose.msra.mxu0 0.0
        %1444 = vmatprep.subr.mxu0 0.0
        %1445 = vmatpush2.xpose.msra.mxu0 0.0
        %1446 = vmatprep.subr.mxu0 0.0
        %1447 = vmatpush2.xpose.msra.mxu0 0.0
        %1448 = vmatprep.subr.mxu0 0.0
        %1449 = vmatpush2.xpose.msra.mxu0 0.0
        %1450 = vmatprep.subr.mxu0 0.0
        %1451 = vmatpush2.xpose.msra.mxu0 0.0
        %1452 = vmatprep.subr.mxu0 0.0
        %1453 = vmatpush2.xpose.msra.mxu0 0.0
        %1454 = vmatprep.subr.mxu0 0.0
        %1455 = vmatpush2.xpose.msra.mxu0 0.0
        %1456 = vmatprep.subr.mxu0 0.0
        %1457 = vmatpush2.xpose.msra.mxu0 0.0
        %1458 = vmatprep.subr.mxu0 0.0
        %1459 = vmatpush2.xpose.msra.mxu0 0.0
        %1460 = vmatprep.subr.mxu0 0.0
        %1461 = vmatpush2.xpose.msra.mxu0 0.0
        %1462 = vmatprep.subr.mxu0 0.0
        %1463 = vmatpush2.xpose.msra.mxu0 0.0
        %1464 = vmatprep.subr.mxu0 0.0
        %1465 = vmatpush2.xpose.msra.mxu0 0.0
        %1466 = vmatprep.subr.mxu0 0.0
        %1467 = vmatpush2.xpose.msra.mxu0 0.0
        %1468 = vmatprep.subr.mxu0 0.0
        %1469 = vmatpush2.xpose.msra.mxu0 0.0
        %1470 = vmatprep.mubr.f32.mxu0 0.0
        %1471 = vmatmul.mubr.f32.gmra.mxu0 %v1401
        %v1472 = vpop.f32.mrf.mxu0
        %v1473 = vadd.f32 0.0, %v1472
        %v1474 = vpop.f32.mrf.mxu0
        %1475 = vdwg.mxu0
        %v1476 = vsel %vm1388, %v1473, -inf
        %1477 = vmax.xlane.f32.xlu0 %v1476
        %v1478 = vpop.xlane.xlu0 %1477
        %v1479 = vsub.f32 %v1473, %v1478
        %v1480 = vmul.f32 %v1479, 1.442695
        %v1481 = vpow.pop %v1480
        %v1482 = vsel %vm1388, %v1481, 0.0
        %1483 = vadd.xlane.f32.xlu0 %v1482
        %v1484 = vpop.xlane.xlu0 %1483
        %v1485 = vrcp.pop %v1484
        %v1486 = vmul.f32 %v1481, %v1485
        %v1488 = vsel %vm1388, %v1486, 0
        %1490 = vmatprep.subr.mxu0 0.0
        %1491 = vmatpush1.msra.mxu0 0.0
        %1492 = vmatprep.subr.mxu0 0.0
        %1493 = vmatpush1.msra.mxu0 0.0
        %1494 = vmatprep.subr.mxu0 0.0
        %1495 = vmatpush1.msra.mxu0 0.0
        %1496 = vmatprep.subr.mxu0 0.0
        %1497 = vmatpush1.msra.mxu0 0.0
        %1498 = vmatprep.subr.mxu0 0.0
        %1499 = vmatpush1.msra.mxu0 0.0
        %1500 = vmatprep.subr.mxu0 0.0
        %1501 = vmatpush1.msra.mxu0 0.0
        %1502 = vmatprep.subr.mxu0 0.0
        %1503 = vmatpush1.msra.mxu0 0.0
        %1504 = vmatprep.subr.mxu0 0.0
        %1505 = vmatpush1.msra.mxu0 0.0
        %1506 = vmatprep.subr.mxu0 0.0
        %1507 = vmatpush1.msra.mxu0 0.0
        %1508 = vmatprep.subr.mxu0 0.0
        %1509 = vmatpush1.msra.mxu0 0.0
        %1510 = vmatprep.subr.mxu0 0.0
        %1511 = vmatpush1.msra.mxu0 0.0
        %1512 = vmatprep.subr.mxu0 0.0
        %1513 = vmatpush1.msra.mxu0 0.0
        %1514 = vmatprep.subr.mxu0 0.0
        %1515 = vmatpush1.msra.mxu0 0.0
        %1516 = vmatprep.subr.mxu0 0.0
        %1517 = vmatpush1.msra.mxu0 0.0
        %1518 = vmatprep.subr.mxu0 0.0
        %1519 = vmatpush1.msra.mxu0 0.0
        %1520 = vmatprep.subr.mxu0 0.0
        %1521 = vmatpush1.msra.mxu0 %v1096
        %1522 = vmatprep.subr.mxu0 0.0
        %1523 = vmatpush2.msra.mxu0 0.0
        %1524 = vmatprep.subr.mxu0 0.0
        %1525 = vmatpush2.msra.mxu0 0.0
        %1526 = vmatprep.subr.mxu0 0.0
        %1527 = vmatpush2.msra.mxu0 0.0
        %1528 = vmatprep.subr.mxu0 0.0
        %1529 = vmatpush2.msra.mxu0 0.0
        %1530 = vmatprep.subr.mxu0 0.0
        %1531 = vmatpush2.msra.mxu0 0.0
        %1532 = vmatprep.subr.mxu0 0.0
        %1533 = vmatpush2.msra.mxu0 0.0
        %1534 = vmatprep.subr.mxu0 0.0
        %1535 = vmatpush2.msra.mxu0 0.0
        %1536 = vmatprep.subr.mxu0 0.0
        %1537 = vmatpush2.msra.mxu0 0.0
        %1538 = vmatprep.subr.mxu0 0.0
        %1539 = vmatpush2.msra.mxu0 0.0
        %1540 = vmatprep.subr.mxu0 0.0
        %1541 = vmatpush2.msra.mxu0 0.0
        %1542 = vmatprep.subr.mxu0 0.0
        %1543 = vmatpush2.msra.mxu0 0.0
        %1544 = vmatprep.subr.mxu0 0.0
        %1545 = vmatpush2.msra.mxu0 0.0
        %1546 = vmatprep.subr.mxu0 0.0
        %1547 = vmatpush2.msra.mxu0 0.0
        %1548 = vmatprep.subr.mxu0 0.0
        %1549 = vmatpush2.msra.mxu0 0.0
        %1550 = vmatprep.subr.mxu0 0.0
        %1551 = vmatpush2.msra.mxu0 0.0
        %1552 = vmatprep.subr.mxu0 0.0
        %1553 = vmatpush2.msra.mxu0 0.0
        %1554 = vmatprep.mubr.f32.mxu0 0.0
        %1555 = vmatmul.mubr.f32.gmra.mxu0 %v1488
        %v1556 = vpop.f32.mrf.mxu0
        %v1557 = vadd.f32 0.0, %v1556
        %v1558 = vpop.f32.mrf.mxu0
        %1559 = vdwg.mxu0
        %v1561 = vsel %vm1388, %v1399, 0
        %1563 = vmatprep.subr.mxu0 0.0
        %1564 = vmatpush1.msra.mxu0 0.0
        %1565 = vmatprep.subr.mxu0 0.0
        %1566 = vmatpush1.msra.mxu0 0.0
        %1567 = vmatprep.subr.mxu0 0.0
        %1568 = vmatpush1.msra.mxu0 0.0
        %1569 = vmatprep.subr.mxu0 0.0
        %1570 = vmatpush1.msra.mxu0 0.0
        %1571 = vmatprep.subr.mxu0 0.0
        %1572 = vmatpush1.msra.mxu0 0.0
        %1573 = vmatprep.subr.mxu0 0.0
        %1574 = vmatpush1.msra.mxu0 0.0
        %1575 = vmatprep.subr.mxu0 0.0
        %1576 = vmatpush1.msra.mxu0 0.0
        %1577 = vmatprep.subr.mxu0 0.0
        %1578 = vmatpush1.msra.mxu0 0.0
        %1579 = vmatprep.subr.mxu0 0.0
        %1580 = vmatpush1.msra.mxu0 0.0
        %1581 = vmatprep.subr.mxu0 0.0
        %1582 = vmatpush1.msra.mxu0 0.0
        %1583 = vmatprep.subr.mxu0 0.0
        %1584 = vmatpush1.msra.mxu0 0.0
        %1585 = vmatprep.subr.mxu0 0.0
        %1586 = vmatpush1.msra.mxu0 0.0
        %1587 = vmatprep.subr.mxu0 0.0
        %1588 = vmatpush1.msra.mxu0 0.0
        %1589 = vmatprep.subr.mxu0 0.0
        %1590 = vmatpush1.msra.mxu0 0.0
        %1591 = vmatprep.subr.mxu0 0.0
        %1592 = vmatpush1.msra.mxu0 0.0
        %1593 = vmatprep.subr.mxu0 0.0
        %1594 = vmatpush1.msra.mxu0 %v1309
        %1595 = vmatprep.subr.mxu0 0.0
        %1596 = vmatpush2.msra.mxu0 0.0
        %1597 = vmatprep.subr.mxu0 0.0
        %1598 = vmatpush2.msra.mxu0 0.0
        %1599 = vmatprep.subr.mxu0 0.0
        %1600 = vmatpush2.msra.mxu0 0.0
        %1601 = vmatprep.subr.mxu0 0.0
        %1602 = vmatpush2.msra.mxu0 0.0
        %1603 = vmatprep.subr.mxu0 0.0
        %1604 = vmatpush2.msra.mxu0 0.0
        %1605 = vmatprep.subr.mxu0 0.0
        %1606 = vmatpush2.msra.mxu0 0.0
        %1607 = vmatprep.subr.mxu0 0.0
        %1608 = vmatpush2.msra.mxu0 0.0
        %1609 = vmatprep.subr.mxu0 0.0
        %1610 = vmatpush2.msra.mxu0 0.0
        %1611 = vmatprep.subr.mxu0 0.0
        %1612 = vmatpush2.msra.mxu0 0.0
        %1613 = vmatprep.subr.mxu0 0.0
        %1614 = vmatpush2.msra.mxu0 0.0
        %1615 = vmatprep.subr.mxu0 0.0
        %1616 = vmatpush2.msra.mxu0 0.0
        %1617 = vmatprep.subr.mxu0 0.0
        %1618 = vmatpush2.msra.mxu0 0.0
        %1619 = vmatprep.subr.mxu0 0.0
        %1620 = vmatpush2.msra.mxu0 0.0
        %1621 = vmatprep.subr.mxu0 0.0
        %1622 = vmatpush2.msra.mxu0 0.0
        %1623 = vmatprep.subr.mxu0 0.0
        %1624 = vmatpush2.msra.mxu0 0.0
        %1625 = vmatprep.subr.mxu0 0.0
        %1626 = vmatpush2.msra.mxu0 0.0
        %1627 = vmatprep.mubr.f32.mxu0 0.0
        %1628 = vmatmul.mubr.f32.gmra.mxu0 %v1561
        %v1629 = vpop.f32.mrf.mxu0
        %v1630 = vadd.f32 %v1557, %v1629
        %v1631 = vpop.f32.mrf.mxu0
        %1632 = vdwg.mxu0
        %v1633 = vmul.f32 %v1630, 0.3
        %1634 = vst [vmem:[%s485] sm:$0xff] %v1633
        %s1635 = sand.u32 %s357, 1
        %s1636 = scalar_lea.sflag [#allocation3], %s1635
        %s1637 = sand.u32 %s357, 1
        %s1638 = smul.addr %s1637, 8
        %s1639 = scalar_lea.vmem [#allocation2], %s1638
        // Predicated region
        $region81: #{tpu_custom_call.1} parent=79 // pred_check
          %p1640 = pneg %p367
        $region82: #{tpu_custom_call.1} parent=79 // pred_check_branch
          %1642 = sbr.rel (%p1640) target = $region84
        $region83: #{tpu_custom_call.1} parent=79 // pred_region
          %s1644 = ssub.s32 128, 128
          %1645 = vsyncadd %s1636, %s1644
          %s1646 = smul.addr %s29, 128
          %s1647 = scalar_lea.hbm %s15, %s1646
          %s1649 = sshll.u32 %s1639, 4
          %s1650 = int_to_ptr.vmem [resolvable:$true] %s1649
          %1652 = dma.vmem_to_hbm [thread:$0]  %s1650, 128, %s1647, %s1636
        $region84: #{tpu_custom_call.1} parent=79 // pred_fallthru
          _
      $region80: #{tpu_custom_call.1} parent=5 // pred_fallthru
        _
      %p1653 = scmp.le.s32.totalorder 2, %s24
      // Predicated region
      $region85: #{tpu_custom_call.1} parent=5 // pred_check
        %p1654 = pneg %p1653
      $region86: #{tpu_custom_call.1} parent=5 // pred_check_branch
        %1656 = sbr.rel (%p1654) target = $region88
      $region87: #{tpu_custom_call.1} parent=5 // pred_region
        %s1657 = ssub.s32 %s24, 2
        // Predicated region
        $region89: #{tpu_custom_call.1} parent=87 // pred_check
          %p1658 = pneg %p373
        $region90: #{tpu_custom_call.1} parent=87 // pred_check_branch
          %1660 = sbr.rel (%p1658) target = $region92
        $region91: #{tpu_custom_call.1} parent=87 // pred_region
          %s1661 = sand.u32 %s358, 1
          %s1662 = scalar_lea.sflag [#allocation3], %s1661
          %s1663 = sand.u32 %s358, 1
          %s1664 = smul.addr %s1663, 8
          %s1665 = scalar_lea.vmem [#allocation2], %s1664
          %1666 = dma.done %s1662, 128
        $region92: #{tpu_custom_call.1} parent=87 // pred_fallthru
          _
      $region88: #{tpu_custom_call.1} parent=5 // pred_fallthru
        _
    $region6: #{tpu_custom_call.1} parent=1 // loop_footer
      %s28 = sadd.s32 1, %s24
    $region7: #{tpu_custom_call.1} parent=1 // loop_footer_branch
      %23 = sbr.rel target = $region3
    $region8: #{tpu_custom_call.1} parent=1 // loop_exit
      _
    %1667 = vsyncpa [#allocation3], 1
    %s1668 = scalar_lea.sflag [#allocation3], 1
    %1669 = vsyncpa %s1668, 1

</llo_original>
